<compile_context>
chip_gen: v6e
topology: v6e:2x2x1
jax: 0.10.0
libtpu: 0.0.40
codegen_flags: <defaults>
</compile_context>

<pallas_src>
import math

import jax
import jax.numpy as jnp
from jax import lax
from jax.experimental import pallas as pl
from jax.experimental.pallas import tpu as pltpu

# bf16 at the MXU inputs (f32 accumulation): native on v6e/v7x, supported on v5e.
# Set to jnp.float32 for bit-closer parity with the f32 PyTorch reference.
MXU_DTYPE = jnp.bfloat16

_PAR1 = pltpu.CompilerParams(dimension_semantics=("parallel",))


def _row_tile(m):
    # Collapse small problems to a single block: per-grid-step overhead dominates
    # at these sizes.  Only tile when the row count is genuinely large.
    if m <= 1024:
        return m
    for t in (1024, 512, 256, 128, 64, 32, 16, 8):
        if m % t == 0:
            return t
    return m


def _ln(x, g, b, eps=1e-5):
    mu = jnp.mean(x, axis=-1, keepdims=True)
    var = jnp.mean(jnp.square(x - mu), axis=-1, keepdims=True)
    return (x - mu) * lax.rsqrt(var + eps) * g + b


def _mm(a, b):
    return jnp.dot(a.astype(MXU_DTYPE), b.astype(MXU_DTYPE),
                   preferred_element_type=jnp.float32)


# ----------------------------------------------------------------------------
# fused dense kernels
# ----------------------------------------------------------------------------
def _input_stage_kernel(x_ref, e_ref, w1_ref, b1_ref, w2_ref, b2_ref, o_ref):
    # fc1 + input_proj fused.  The feedback-embedding branch of input_proj is
    # folded into `e_ref` (a gathered (rows, hidden) table prepared once at
    # param-prep), removing the ragged (hidden+emb_dim) concat contraction.
    h = _mm(x_ref[...], w1_ref[...]) + b1_ref[...]
    o_ref[...] = _mm(h, w2_ref[...]) + b2_ref[...] + e_ref[...]


def input_stage(x2d, e2d, w1, b1, w2, b2):
    m, k = x2d.shape
    inner = w1.shape[1]
    n = w2.shape[1]
    tm = _row_tile(m)
    return pl.pallas_call(
        _input_stage_kernel,
        out_shape=jax.ShapeDtypeStruct((m, n), jnp.float32),
        grid=(m // tm,),
        in_specs=[
            pl.BlockSpec((tm, k), lambda i: (i, 0)),
            pl.BlockSpec((tm, n), lambda i: (i, 0)),
            pl.BlockSpec((k, inner), lambda i: (0, 0)),
            pl.BlockSpec((1, inner), lambda i: (0, 0)),
            pl.BlockSpec((inner, n), lambda i: (0, 0)),
            pl.BlockSpec((1, n), lambda i: (0, 0)),
        ],
        out_specs=pl.BlockSpec((tm, n), lambda i: (i, 0)),
        compiler_params=_PAR1,
    )(x2d, e2d, w1, b1, w2, b2)


def _ln_matmul_kernel(x_ref, g_ref, b_ref, w_ref, o_ref):
    # FastFFlayer front-end: LayerNorm + slow_net projection (no bias), fused.
    # slow_w columns are pre-permuted to blocked [Q|K|V|BETA] and zero-padded to
    # a multiple of 128 so the output store is lane-dense.
    o_ref[...] = _mm(_ln(x_ref[...], g_ref[...], b_ref[...]), w_ref[...])


def ln_matmul(x2d, g, b, w):
    m, k = x2d.shape
    n = w.shape[1]
    tm = _row_tile(m)
    return pl.pallas_call(
        _ln_matmul_kernel,
        out_shape=jax.ShapeDtypeStruct((m, n), jnp.float32),
        grid=(m // tm,),
        in_specs=[
            pl.BlockSpec((tm, k), lambda i: (i, 0)),
            pl.BlockSpec((1, k), lambda i: (0, 0)),
            pl.BlockSpec((1, k), lambda i: (0, 0)),
            pl.BlockSpec((k, n), lambda i: (0, 0)),
        ],
        out_specs=pl.BlockSpec((tm, n), lambda i: (i, 0)),
        compiler_params=_PAR1,
    )(x2d, g, b, w)


def _outproj_ffn_kernel(y_ref, x_ref, ow_ref, g_ref, b_ref,
                        w1_ref, b1_ref, w2_ref, b2_ref, o_ref):
    # FastFFlayer back-end fused with the following TransformerFFlayers block:
    #   z = y @ out_w + x                       (out_linear, no bias, + residual)
    #   o = Linear(ReLU(Linear(LN(z)))) + z     (FFN + residual)
    # TODO(synk): nn.Dropout after out_linear / inside the FFN is omitted
    # (inference-mode forward).
    z = _mm(y_ref[...], ow_ref[...]) + x_ref[...]
    h = _mm(_ln(z, g_ref[...], b_ref[...]), w1_ref[...]) + b1_ref[...]
    h = jnp.maximum(h, 0.0)
    o_ref[...] = _mm(h, w2_ref[...]) + b2_ref[...] + z


def outproj_ffn(y2d, x2d, out_w, g, b, w1, b1, w2, b2):
    m, hidden = x2d.shape
    ff = w1.shape[1]
    tm = _row_tile(m)
    return pl.pallas_call(
        _outproj_ffn_kernel,
        out_shape=jax.ShapeDtypeStruct((m, hidden), jnp.float32),
        grid=(m // tm,),
        in_specs=[
            pl.BlockSpec((tm, hidden), lambda i: (i, 0)),
            pl.BlockSpec((tm, hidden), lambda i: (i, 0)),
            pl.BlockSpec((hidden, hidden), lambda i: (0, 0)),
            pl.BlockSpec((1, hidden), lambda i: (0, 0)),
            pl.BlockSpec((1, hidden), lambda i: (0, 0)),
            pl.BlockSpec((hidden, ff), lambda i: (0, 0)),
            pl.BlockSpec((1, ff), lambda i: (0, 0)),
            pl.BlockSpec((ff, hidden), lambda i: (0, 0)),
            pl.BlockSpec((1, hidden), lambda i: (0, 0)),
        ],
        out_specs=pl.BlockSpec((tm, hidden), lambda i: (i, 0)),
        compiler_params=_PAR1,
    )(y2d, x2d, out_w, g, b, w1, b1, w2, b2)


def _linear_kernel(x_ref, w_ref, b_ref, o_ref):
    o_ref[...] = _mm(x_ref[...], w_ref[...]) + b_ref[...]


def linear(x2d, w, b):
    # classifier; w/b are zero-padded to 128 output columns (lane-dense store),
    # the wrapper slices back to num_classes.
    m, k = x2d.shape
    n = w.shape[1]
    tm = _row_tile(m)
    return pl.pallas_call(
        _linear_kernel,
        out_shape=jax.ShapeDtypeStruct((m, n), jnp.float32),
        grid=(m // tm,),
        in_specs=[
            pl.BlockSpec((tm, k), lambda i: (i, 0)),
            pl.BlockSpec((k, n), lambda i: (0, 0)),
            pl.BlockSpec((1, n), lambda i: (0, 0)),
        ],
        out_specs=pl.BlockSpec((tm, n), lambda i: (i, 0)),
        compiler_params=_PAR1,
    )(x2d, w, b)


# ----------------------------------------------------------------------------
# DeltaNet fast-weight (delta-rule) recurrence -- the serial hotspot
# ----------------------------------------------------------------------------
def _delta_rule_kernel(q_ref, k_ref, v_ref, beta_ref, o_ref, w_ref):
    """Lane-packed delta rule.

        v_old_t = W_{t-1} k_t
        W_t     = W_{t-1} + beta_t (v_t - v_old_t) k_t^T
        y_t     = W_t q_t = W_{t-1} q_t + beta_t (v_t - v_old_t) (k_t . q_t)

    Lane axis packs (dv, batch*head) -> dv*P lanes (=128 here), so W is a
    (dk, dv*P) slab = 2 full f32 vregs.  q/k arrive pre-repeated over dv, so
    per-(d,p) lanes evolve independently and every per-step op is a dense
    full-lane FMA / sublane reduce.  Activations are hoisted out of the serial
    loop; the loop is statically unrolled with W carried in vector registers.
    Scratch w_ref only persists W across T-chunks (grid axis 1).
    """
    @pl.when(pl.program_id(1) == 0)
    def _():
        w_ref[...] = jnp.zeros_like(w_ref)

    def softmax_dk(x):  # softmax over the dim_head axis (axis=1); EUP exp + rcp
        m = jnp.max(x, axis=1, keepdims=True)
        e = jnp.exp(x - m)
        return e * pl.reciprocal(jnp.sum(e, axis=1, keepdims=True), approx=True)

    qs = softmax_dk(q_ref[...])                                   # (tt, dk, lt)
    ks = softmax_dk(k_ref[...])
    bs = pl.reciprocal(1.0 + jnp.exp(-beta_ref[...]), approx=True)  # (tt, 1, lt)
    kq = jnp.sum(qs * ks, axis=1, keepdims=True)                  # (tt, 1, lt)
    v = v_ref[...]                                                # (tt, 1, lt)

    w = w_ref[...]                                                # (dk, lt), reg-resident
    for t in range(q_ref.shape[0]):                               # static unroll
        k_t = ks[t]                                               # (dk, lt)
        q_t = qs[t]                                               # (dk, lt)
        u_k = jnp.sum(w * k_t, axis=0, keepdims=True)             # W k   -> (1, lt)
        u_q = jnp.sum(w * q_t, axis=0, keepdims=True)             # W q   -> (1, lt)
        delta = bs[t] * (v[t] - u_k)                              # (1, lt)
        o_ref[t] = u_q + delta * kq[t]                            # y_t = W_t q_t
        w = w + k_t * delta                                       # rank-1 update
    w_ref[...] = w


def _lane_tile(lanes):
    # Split the lane axis only when each chunk keeps >=128 dense lanes: gives
    # v7x's two TensorCores independent work on the "parallel" grid axis.
    return lanes // 2 if (lanes % 256 == 0) else lanes


def _t_tile(t_len):
    # T-chunking keeps VMEM bounded (v7x: 64 MiB physical / 32 MiB scoped) and
    # bounds the unrolled code size; W persists across chunks in scratch.
    if t_len <= 32:
        return t_len
    for t in (32, 16, 8, 4, 2):
        if t_len % t == 0:
            return t
    return t_len


def delta_rule_packed(q_r, k_r, v_p, b_p):
    t_len, dk, lanes = q_r.shape
    lt = _lane_tile(lanes)
    tt = _t_tile(t_len)
    return pl.pallas_call(
        _delta_rule_kernel,
        out_shape=jax.ShapeDtypeStruct((t_len, 1, lanes), jnp.float32),
        grid=(lanes // lt, t_len // tt),
        in_specs=[
            pl.BlockSpec((tt, dk, lt), lambda i, j: (j, 0, i)),
            pl.BlockSpec((tt, dk, lt), lambda i, j: (j, 0, i)),
            pl.BlockSpec((tt, 1, lt), lambda i, j: (j, 0, i)),
            pl.BlockSpec((tt, 1, lt), lambda i, j: (j, 0, i)),
        ],
        out_specs=pl.BlockSpec((tt, 1, lt), lambda i, j: (j, 0, i)),
        scratch_shapes=[pltpu.VMEM((dk, lt), jnp.float32)],   # fast weights across T-chunks
        compiler_params=pltpu.CompilerParams(
            dimension_semantics=("parallel", "arbitrary"),
            vmem_limit_bytes=32 << 20),
    )(q_r, k_r, v_p, b_p)


# ----------------------------------------------------------------------------
# layers
# ----------------------------------------------------------------------------
def fast_weight_block(h2d, p, s_len, bsz, num_head, dim_head):
    """FastFFlayer front half: LN -> slow_net -> packed delta-rule recurrence.

    Returns y2d (rows, hidden) ready for the fused out_linear+FFN kernel.
    The relayout to the packed recurrence format (lane = d*(B*H) + b*H + h,
    with q/k repeated over d) is pure layout plumbing done in XLA on tiny
    tensors between the two pallas_calls.
    """
    hd = num_head * dim_head
    pairs = bsz * num_head
    lanes = dim_head * pairs

    qkvb = ln_matmul(h2d, p["ln_g"], p["ln_b"], p["slow_w"])      # (S*B, padded cols)
    qkvb = qkvb.reshape(s_len, bsz, -1)
    q = qkvb[..., 0:hd].reshape(s_len, bsz, num_head, dim_head)
    k = qkvb[..., hd:2 * hd].reshape(s_len, bsz, num_head, dim_head)
    v = qkvb[..., 2 * hd:3 * hd].reshape(s_len, bsz, num_head, dim_head)
    beta = qkvb[..., 3 * hd:3 * hd + num_head]                    # (S, B, H)

    def rep(a):  # (S,B,H,dk) -> (S, dk, dv*B*H): pair axis dense on lanes, repeat over dv
        a = jnp.transpose(a, (0, 3, 1, 2))                        # (S, dk, B, H)
        a = jnp.broadcast_to(a[:, :, None, :, :],
                             (s_len, dim_head, dim_head, bsz, num_head))
        return a.reshape(s_len, dim_head, lanes)

    q_r = rep(q)
    k_r = rep(k)
    v_p = jnp.transpose(v, (0, 3, 1, 2)).reshape(s_len, 1, lanes)
    b_p = jnp.broadcast_to(beta[:, None, :, :],
                           (s_len, dim_head, bsz, num_head)).reshape(s_len, 1, lanes)

    y_p = delta_rule_packed(q_r, k_r, v_p, b_p)                   # (S, 1, dv*B*H)
    y = y_p.reshape(s_len, dim_head, bsz, num_head)
    return jnp.transpose(y, (0, 2, 3, 1)).reshape(s_len * bsz, hd)


def deltanet_forward(params, x, fb, cfg):
    """DeltaNetModel.forward: x (S, B, input_size), fb (S, B) int -> (logits, None)."""
    s_len, bsz, in_dim = x.shape
    n_cls = cfg["num_classes"]
    x2d = x.reshape(s_len * bsz, in_dim)
    e2d = jnp.take(params["emb_tbl"], fb.reshape(-1), axis=0)     # folded feedback emb
    h2d = input_stage(x2d, e2d, params["fc1_w"], params["fc1_b"],
                      params["proj_wx"], params["proj_b"])
    for lp in params["layers"]:
        y2d = fast_weight_block(h2d, lp["fast"], s_len, bsz,
                                cfg["num_head"], cfg["dim_head"])
        ff = lp["ff"]
        h2d = outproj_ffn(y2d, h2d, lp["fast"]["out_w"],
                          ff["ln_g"], ff["ln_b"],
                          ff["w1"], ff["b1"], ff["w2"], ff["b2"])
    logits = linear(h2d, params["out_w"], params["out_b"])[:, :n_cls]
    return logits.reshape(s_len, bsz, n_cls), None


# ----------------------------------------------------------------------------
# deterministic parameter init (mirrors torch defaults; Linear weights stored
# pre-transposed as (fan_in, fan_out)) + one-time parameter preparation
# ----------------------------------------------------------------------------
def _linear_init(key, fan_in, fan_out, bias=True):
    kw, kb = jax.random.split(key)
    lim = 1.0 / math.sqrt(fan_in)
    w = jax.random.uniform(kw, (fan_in, fan_out), jnp.float32, -lim, lim)
    if not bias:
        return w
    b = jax.random.uniform(kb, (1, fan_out), jnp.float32, -lim, lim)
    return w, b


def init_params(key, cfg):
    hidden, n_head, dh = cfg["hidden_size"], cfg["num_head"], cfg["dim_head"]
    n_cls, emb_dim, ff = cfg["num_classes"], cfg["emb_dim"], cfg["dim_ff"]
    keys = iter(jax.random.split(key, 4 + 4 * cfg["num_layers"]))
    fc1_w, fc1_b = _linear_init(next(keys), cfg["input_size"], hidden)
    emb = jax.random.normal(next(keys), (n_cls, emb_dim), jnp.float32)
    proj_w, proj_b = _linear_init(next(keys), hidden + emb_dim, hidden)
    layers = []
    for _ in range(cfg["num_layers"]):
        w1, b1 = _linear_init(next(keys), hidden, ff)
        w2, b2 = _linear_init(next(keys), ff, hidden)
        layers.append(dict(
            fast=dict(
                ln_g=jnp.ones((1, hidden), jnp.float32),
                ln_b=jnp.zeros((1, hidden), jnp.float32),
                # per-head column blocks ordered [q | k | v | beta] (torch layout)
                slow_w=_linear_init(next(keys), hidden, n_head * (3 * dh + 1), bias=False),
                out_w=_linear_init(next(keys), hidden, hidden, bias=False),
            ),
            ff=dict(
                ln_g=jnp.ones((1, hidden), jnp.float32),
                ln_b=jnp.zeros((1, hidden), jnp.float32),
                w1=w1, b1=b1, w2=w2, b2=b2,
            ),
        ))
    out_w, out_b = _linear_init(next(keys), hidden, n_cls)
    return dict(fc1_w=fc1_w, fc1_b=fc1_b, emb=emb,
                proj_wx=proj_w[:hidden], proj_we=proj_w[hidden:], proj_b=proj_b,
                layers=layers, out_w=out_w, out_b=out_b)


def _permute_pad_slow_w(w, num_head, dim_head):
    # per-head interleaved [q|k|v|beta] -> blocked [Q|K|V|BETA] (each block
    # h-major, channel-minor) + zero-pad to a lane-dense multiple of 128.
    # NOTE: this is the column permutation real PyTorch checkpoints would need.
    hidden = w.shape[0]
    c = 3 * dim_head + 1
    w3 = w.reshape(hidden, num_head, c)
    q = w3[:, :, 0:dim_head].reshape(hidden, num_head * dim_head)
    k = w3[:, :, dim_head:2 * dim_head].reshape(hidden, num_head * dim_head)
    v = w3[:, :, 2 * dim_head:3 * dim_head].reshape(hidden, num_head * dim_head)
    beta = w3[:, :, 3 * dim_head:].reshape(hidden, num_head)
    blocked = jnp.concatenate([q, k, v, beta], axis=1)
    n = blocked.shape[1]
    n_pad = ((n + 127) // 128) * 128
    return jnp.pad(blocked, ((0, 0), (0, n_pad - n)))


def _pad_cols(w, b, mult=128):
    n = w.shape[1]
    n_pad = ((n + mult - 1) // mult) * mult
    return (jnp.pad(w, ((0, 0), (0, n_pad - n))),
            jnp.pad(b, ((0, 0), (0, n_pad - n))))


def prepare_params(params, cfg):
    """One-time preparation (outside the jitted forward):
       * fold feedback_emb through input_proj's embedding slice into a gather table
       * permute/pad slow_net columns for the packed recurrence layout
       * zero-pad the classifier to 128 lane-dense output columns."""
    n_head, dh = cfg["num_head"], cfg["dim_head"]
    layers = []
    for lp in params["layers"]:
        fast = dict(lp["fast"])
        fast["slow_w"] = _permute_pad_slow_w(lp["fast"]["slow_w"], n_head, dh)
        layers.append(dict(fast=fast, ff=dict(lp["ff"])))
    out_w, out_b = _pad_cols(params["out_w"], params["out_b"])
    return dict(
        fc1_w=params["fc1_w"], fc1_b=params["fc1_b"],
        proj_wx=params["proj_wx"], proj_b=params["proj_b"],
        emb_tbl=jnp.dot(params["emb"], params["proj_we"]),
        layers=layers, out_w=out_w, out_b=out_b)


# ----------------------------------------------------------------------------
# main
# ----------------------------------------------------------------------------
if __name__ == "__main__":
    cfg = dict(input_size=32, hidden_size=64, num_classes=5, num_layers=2,
               num_head=4, dim_head=16, dim_ff=128, emb_dim=10, dropout=0.0)
    assert cfg["num_head"] * cfg["dim_head"] == cfg["hidden_size"]

    root = jax.random.PRNGKey(0)
    k_param, k_x, k_fb = jax.random.split(root, 3)
    params = prepare_params(init_params(k_param, cfg), cfg)

    s_len, bsz = 8, 2
    x = jax.random.normal(k_x, (s_len, bsz, cfg["input_size"]), jnp.float32)
    fb = jax.random.randint(k_fb, (s_len, bsz), 0, cfg["num_classes"])

    fwd = jax.jit(lambda p, xx, ff: deltanet_forward(p, xx, ff, cfg))
    logits, state = fwd(params, x, fb)
    jax.block_until_ready(logits)

    assert logits.shape == (s_len, bsz, cfg["num_classes"])
    assert state is None
    assert bool(jnp.all(jnp.isfinite(logits)))
    print("KERNEL_OK")
</pallas_src>

<mosaic_0001>
module attributes {stable_mosaic.version = 11 : i64} {
  func.func @_ln_matmul_kernel(%arg0: i32, %arg1: memref<16x64xf32, #tpu.memory_space<vmem>>, %arg2: memref<1x64xf32, #tpu.memory_space<vmem>>, %arg3: memref<1x64xf32, #tpu.memory_space<vmem>>, %arg4: memref<64x256xf32, #tpu.memory_space<vmem>>, %arg5: memref<16x256xf32, #tpu.memory_space<vmem>>) attributes {dimension_semantics = [#tpu.dimension_semantics<parallel>], iteration_bounds = array<i64: 1>, scalar_prefetch = 0 : i64, scratch_operands = 0 : i64, tpu.core_type = #tpu.core_type<tc>, window_params = [{transform_indices = @transform_0, window_bounds = array<i64: 16, 64>}, {pipeline_mode = #tpu.pipeline_mode<synchronous>, transform_indices = @transform_1, window_bounds = array<i64: 1, 64>}, {pipeline_mode = #tpu.pipeline_mode<synchronous>, transform_indices = @transform_2, window_bounds = array<i64: 1, 64>}, {pipeline_mode = #tpu.pipeline_mode<synchronous>, transform_indices = @transform_3, window_bounds = array<i64: 64, 256>}, {transform_indices = @transform_4, window_bounds = array<i64: 16, 256>}]} {
    %c0 = arith.constant 0 : index
    %c0_0 = arith.constant 0 : index
    %0 = vector.load %arg1[%c0, %c0_0] : memref<16x64xf32, #tpu.memory_space<vmem>>, vector<16x64xf32>
    %c0_1 = arith.constant 0 : index
    %c0_2 = arith.constant 0 : index
    %1 = vector.load %arg2[%c0_1, %c0_2] : memref<1x64xf32, #tpu.memory_space<vmem>>, vector<1x64xf32>
    %c0_3 = arith.constant 0 : index
    %c0_4 = arith.constant 0 : index
    %2 = vector.load %arg3[%c0_3, %c0_4] : memref<1x64xf32, #tpu.memory_space<vmem>>, vector<1x64xf32>
    %cst = arith.constant dense<0.000000e+00> : vector<16xf32>
    %3 = vector.multi_reduction <add>, %0, %cst [1] : vector<16x64xf32> to vector<16xf32>
    %4 = vector.shape_cast %3 : vector<16xf32> to vector<16x1xf32>
    %cst_5 = arith.constant 6.400000e+01 : f32
    %5 = vector.broadcast %cst_5 : f32 to vector<16x1xf32>
    %6 = arith.divf %4, %5 : vector<16x1xf32>
    %7 = vector.broadcast %6 : vector<16x1xf32> to vector<16x64xf32>
    %8 = arith.subf %0, %7 : vector<16x64xf32>
    %9 = arith.mulf %8, %8 : vector<16x64xf32>
    %cst_6 = arith.constant dense<0.000000e+00> : vector<16xf32>
    %10 = vector.multi_reduction <add>, %9, %cst_6 [1] : vector<16x64xf32> to vector<16xf32>
    %11 = vector.shape_cast %10 : vector<16xf32> to vector<16x1xf32>
    %cst_7 = arith.constant 6.400000e+01 : f32
    %12 = vector.broadcast %cst_7 : f32 to vector<16x1xf32>
    %13 = arith.divf %11, %12 : vector<16x1xf32>
    %14 = vector.broadcast %6 : vector<16x1xf32> to vector<16x64xf32>
    %15 = arith.subf %0, %14 : vector<16x64xf32>
    %cst_8 = arith.constant 9.99999974E-6 : f32
    %16 = vector.broadcast %cst_8 : f32 to vector<16x1xf32>
    %17 = arith.addf %13, %16 : vector<16x1xf32>
    %18 = math.rsqrt %17 : vector<16x1xf32>
    %19 = vector.broadcast %18 : vector<16x1xf32> to vector<16x64xf32>
    %20 = arith.mulf %15, %19 : vector<16x64xf32>
    %21 = vector.broadcast %1 : vector<1x64xf32> to vector<16x64xf32>
    %22 = arith.mulf %20, %21 : vector<16x64xf32>
    %23 = vector.broadcast %2 : vector<1x64xf32> to vector<16x64xf32>
    %24 = arith.addf %22, %23 : vector<16x64xf32>
    %c0_9 = arith.constant 0 : index
    %c0_10 = arith.constant 0 : index
    %25 = vector.load %arg4[%c0_9, %c0_10] : memref<64x256xf32, #tpu.memory_space<vmem>>, vector<64x256xf32>
    %26 = arith.truncf %24 : vector<16x64xf32> to vector<16x64xbf16>
    %27 = arith.truncf %25 : vector<64x256xf32> to vector<64x256xbf16>
    %cst_11 = arith.constant dense<0.000000e+00> : vector<16x256xf32>
    %28 = tpu.matmul %26, %27, %cst_11 {dimension_numbers = #tpu.dot_dimension_numbers<[1], [0], [0], [1], [0, 0, 1, 1], [], []>} : vector<16x64xbf16>, vector<64x256xbf16>, vector<16x256xf32> -> vector<16x256xf32>
    %c0_12 = arith.constant 0 : index
    %c0_13 = arith.constant 0 : index
    %29 = vector.load %arg5[%c0_12, %c0_13] : memref<16x256xf32, #tpu.memory_space<vmem>>, vector<16x256xf32>
    tpu.vector_store %arg5[%c0_12, %c0_13], %28 {strides = array<i32>} : memref<16x256xf32, #tpu.memory_space<vmem>>, vector<16x256xf32>,
    return
  }
  func.func @transform_0(%arg0: i32) -> (i32, i32) {
    %c0_i32 = arith.constant 0 : i32
    %c0_i32_0 = arith.constant 0 : i32
    return %arg0, %c0_i32 : i32, i32
  }
  func.func @transform_1(%arg0: i32) -> (i32, i32) {
    %c0_i32 = arith.constant 0 : i32
    %c0_i32_0 = arith.constant 0 : i32
    %c0_i32_1 = arith.constant 0 : i32
    return %c0_i32, %c0_i32_0 : i32, i32
  }
  func.func @transform_2(%arg0: i32) -> (i32, i32) {
    %c0_i32 = arith.constant 0 : i32
    %c0_i32_0 = arith.constant 0 : i32
    %c0_i32_1 = arith.constant 0 : i32
    return %c0_i32, %c0_i32_0 : i32, i32
  }
  func.func @transform_3(%arg0: i32) -> (i32, i32) {
    %c0_i32 = arith.constant 0 : i32
    %c0_i32_0 = arith.constant 0 : i32
    %c0_i32_1 = arith.constant 0 : i32
    return %c0_i32, %c0_i32_0 : i32, i32
  }
  func.func @transform_4(%arg0: i32) -> (i32, i32) {
    %c0_i32 = arith.constant 0 : i32
    %c0_i32_0 = arith.constant 0 : i32
    return %arg0, %c0_i32 : i32, i32
  }
}

module attributes {stable_mosaic.version = 11 : i64} {
  func.func @_input_stage_kernel(%arg0: i32, %arg1: memref<16x32xf32, #tpu.memory_space<vmem>>, %arg2: memref<16x64xf32, #tpu.memory_space<vmem>>, %arg3: memref<32x64xf32, #tpu.memory_space<vmem>>, %arg4: memref<1x64xf32, #tpu.memory_space<vmem>>, %arg5: memref<64x64xf32, #tpu.memory_space<vmem>>, %arg6: memref<1x64xf32, #tpu.memory_space<vmem>>, %arg7: memref<16x64xf32, #tpu.memory_space<vmem>>) attributes {dimension_semantics = [#tpu.dimension_semantics<parallel>], iteration_bounds = array<i64: 1>, scalar_prefetch = 0 : i64, scratch_operands = 0 : i64, tpu.core_type = #tpu.core_type<tc>, window_params = [{transform_indices = @transform_0, window_bounds = array<i64: 16, 32>}, {transform_indices = @transform_1, window_bounds = array<i64: 16, 64>}, {pipeline_mode = #tpu.pipeline_mode<synchronous>, transform_indices = @transform_2, window_bounds = array<i64: 32, 64>}, {pipeline_mode = #tpu.pipeline_mode<synchronous>, transform_indices = @transform_3, window_bounds = array<i64: 1, 64>}, {pipeline_mode = #tpu.pipeline_mode<synchronous>, transform_indices = @transform_4, window_bounds = array<i64: 64, 64>}, {pipeline_mode = #tpu.pipeline_mode<synchronous>, transform_indices = @transform_5, window_bounds = array<i64: 1, 64>}, {transform_indices = @transform_6, window_bounds = array<i64: 16, 64>}]} {
    %c0 = arith.constant 0 : index
    %c0_0 = arith.constant 0 : index
    %0 = vector.load %arg1[%c0, %c0_0] : memref<16x32xf32, #tpu.memory_space<vmem>>, vector<16x32xf32>
    %c0_1 = arith.constant 0 : index
    %c0_2 = arith.constant 0 : index
    %1 = vector.load %arg3[%c0_1, %c0_2] : memref<32x64xf32, #tpu.memory_space<vmem>>, vector<32x64xf32>
    %2 = arith.truncf %0 : vector<16x32xf32> to vector<16x32xbf16>
    %3 = arith.truncf %1 : vector<32x64xf32> to vector<32x64xbf16>
    %cst = arith.constant dense<0.000000e+00> : vector<16x64xf32>
    %4 = tpu.matmul %2, %3, %cst {dimension_numbers = #tpu.dot_dimension_numbers<[1], [0], [0], [1], [0, 0, 1, 1], [], []>} : vector<16x32xbf16>, vector<32x64xbf16>, vector<16x64xf32> -> vector<16x64xf32>
    %c0_3 = arith.constant 0 : index
    %c0_4 = arith.constant 0 : index
    %5 = vector.load %arg4[%c0_3, %c0_4] : memref<1x64xf32, #tpu.memory_space<vmem>>, vector<1x64xf32>
    %6 = vector.broadcast %5 : vector<1x64xf32> to vector<16x64xf32>
    %7 = arith.addf %4, %6 : vector<16x64xf32>
    %c0_5 = arith.constant 0 : index
    %c0_6 = arith.constant 0 : index
    %8 = vector.load %arg5[%c0_5, %c0_6] : memref<64x64xf32, #tpu.memory_space<vmem>>, vector<64x64xf32>
    %9 = arith.truncf %7 : vector<16x64xf32> to vector<16x64xbf16>
    %10 = arith.truncf %8 : vector<64x64xf32> to vector<64x64xbf16>
    %cst_7 = arith.constant dense<0.000000e+00> : vector<16x64xf32>
    %11 = tpu.matmul %9, %10, %cst_7 {dimension_numbers = #tpu.dot_dimension_numbers<[1], [0], [0], [1], [0, 0, 1, 1], [], []>} : vector<16x64xbf16>, vector<64x64xbf16>, vector<16x64xf32> -> vector<16x64xf32>
    %c0_8 = arith.constant 0 : index
    %c0_9 = arith.constant 0 : index
    %12 = vector.load %arg6[%c0_8, %c0_9] : memref<1x64xf32, #tpu.memory_space<vmem>>, vector<1x64xf32>
    %13 = vector.broadcast %12 : vector<1x64xf32> to vector<16x64xf32>
    %14 = arith.addf %11, %13 : vector<16x64xf32>
    %c0_10 = arith.constant 0 : index
    %c0_11 = arith.constant 0 : index
    %15 = vector.load %arg2[%c0_10, %c0_11] : memref<16x64xf32, #tpu.memory_space<vmem>>, vector<16x64xf32>
    %16 = arith.addf %14, %15 : vector<16x64xf32>
    %c0_12 = arith.constant 0 : index
    %c0_13 = arith.constant 0 : index
    %17 = vector.load %arg7[%c0_12, %c0_13] : memref<16x64xf32, #tpu.memory_space<vmem>>, vector<16x64xf32>
    tpu.vector_store %arg7[%c0_12, %c0_13], %16 {strides = array<i32>} : memref<16x64xf32, #tpu.memory_space<vmem>>, vector<16x64xf32>,
    return
  }
  func.func @transform_0(%arg0: i32) -> (i32, i32) {
    %c0_i32 = arith.constant 0 : i32
    %c0_i32_0 = arith.constant 0 : i32
    return %arg0, %c0_i32 : i32, i32
  }
  func.func @transform_1(%arg0: i32) -> (i32, i32) {
    %c0_i32 = arith.constant 0 : i32
    %c0_i32_0 = arith.constant 0 : i32
    return %arg0, %c0_i32 : i32, i32
  }
  func.func @transform_2(%arg0: i32) -> (i32, i32) {
    %c0_i32 = arith.constant 0 : i32
    %c0_i32_0 = arith.constant 0 : i32
    %c0_i32_1 = arith.constant 0 : i32
    return %c0_i32, %c0_i32_0 : i32, i32
  }
  func.func @transform_3(%arg0: i32) -> (i32, i32) {
    %c0_i32 = arith.constant 0 : i32
    %c0_i32_0 = arith.constant 0 : i32
    %c0_i32_1 = arith.constant 0 : i32
    return %c0_i32, %c0_i32_0 : i32, i32
  }
  func.func @transform_4(%arg0: i32) -> (i32, i32) {
    %c0_i32 = arith.constant 0 : i32
    %c0_i32_0 = arith.constant 0 : i32
    %c0_i32_1 = arith.constant 0 : i32
    return %c0_i32, %c0_i32_0 : i32, i32
  }
  func.func @transform_5(%arg0: i32) -> (i32, i32) {
    %c0_i32 = arith.constant 0 : i32
    %c0_i32_0 = arith.constant 0 : i32
    %c0_i32_1 = arith.constant 0 : i32
    return %c0_i32, %c0_i32_0 : i32, i32
  }
  func.func @transform_6(%arg0: i32) -> (i32, i32) {
    %c0_i32 = arith.constant 0 : i32
    %c0_i32_0 = arith.constant 0 : i32
    return %arg0, %c0_i32 : i32, i32
  }
}

module attributes {stable_mosaic.version = 11 : i64} {
  func.func @_delta_rule_kernel(%arg0: i32, %arg1: i32, %arg2: memref<8x16x128xf32, #tpu.memory_space<vmem>>, %arg3: memref<8x16x128xf32, #tpu.memory_space<vmem>>, %arg4: memref<8x1x128xf32, #tpu.memory_space<vmem>>, %arg5: memref<8x1x128xf32, #tpu.memory_space<vmem>>, %arg6: memref<8x1x128xf32, #tpu.memory_space<vmem>>, %arg7: memref<16x128xf32, #tpu.memory_space<vmem>>) attributes {dimension_semantics = [#tpu.dimension_semantics<parallel>, #tpu.dimension_semantics<arbitrary>], iteration_bounds = array<i64: 1, 1>, scalar_prefetch = 0 : i64, scratch_operands = 1 : i64, tpu.core_type = #tpu.core_type<tc>, window_params = [{transform_indices = @transform_0, window_bounds = array<i64: 8, 16, 128>}, {transform_indices = @transform_1, window_bounds = array<i64: 8, 16, 128>}, {transform_indices = @transform_2, window_bounds = array<i64: 8, 1, 128>}, {transform_indices = @transform_3, window_bounds = array<i64: 8, 1, 128>}, {transform_indices = @transform_4, window_bounds = array<i64: 8, 1, 128>}]} {
    %c0_i32 = arith.constant 0 : i32
    %0 = arith.cmpi eq, %arg1, %c0_i32 : i32
    %1 = arith.extui %0 : i1 to i32
    %c0_i32_0 = arith.constant 0 : i32
    %2 = arith.cmpi ne, %1, %c0_i32_0 : i32
    scf.if %2 {
      %cst_55 = arith.constant 0.000000e+00 : f32
      %246 = vector.broadcast %cst_55 : f32 to vector<16x128xf32>
      %c0_56 = arith.constant 0 : index
      %c0_57 = arith.constant 0 : index
      %247 = vector.load %arg7[%c0_56, %c0_57] : memref<16x128xf32, #tpu.memory_space<vmem>>, vector<16x128xf32>
      tpu.vector_store %arg7[%c0_56, %c0_57], %246 {strides = array<i32>} : memref<16x128xf32, #tpu.memory_space<vmem>>, vector<16x128xf32>,
    } else {
    }
    %c0 = arith.constant 0 : index
    %c0_1 = arith.constant 0 : index
    %c0_2 = arith.constant 0 : index
    %3 = vector.load %arg2[%c0, %c0_1, %c0_2] : memref<8x16x128xf32, #tpu.memory_space<vmem>>, vector<8x16x128xf32>
    %cst = arith.constant dense<0xFF800000> : vector<8x128xf32>
    %4 = vector.multi_reduction <maximumf>, %3, %cst [1] : vector<8x16x128xf32> to vector<8x128xf32>
    %5 = vector.shape_cast %4 : vector<8x128xf32> to vector<8x1x128xf32>
    %6 = vector.broadcast %5 : vector<8x1x128xf32> to vector<8x16x128xf32>
    %7 = arith.subf %3, %6 : vector<8x16x128xf32>
    %8 = math.exp %7 : vector<8x16x128xf32>
    %cst_3 = arith.constant dense<0.000000e+00> : vector<8x128xf32>
    %9 = vector.multi_reduction <add>, %8, %cst_3 [1] : vector<8x16x128xf32> to vector<8x128xf32>
    %10 = vector.shape_cast %9 : vector<8x128xf32> to vector<8x1x128xf32>
    %11 = tpu.reciprocal %10 {approx = true} : vector<8x1x128xf32> -> vector<8x1x128xf32>
    %12 = vector.broadcast %11 : vector<8x1x128xf32> to vector<8x16x128xf32>
    %13 = arith.mulf %8, %12 : vector<8x16x128xf32>
    %c0_4 = arith.constant 0 : index
    %c0_5 = arith.constant 0 : index
    %c0_6 = arith.constant 0 : index
    %14 = vector.load %arg3[%c0_4, %c0_5, %c0_6] : memref<8x16x128xf32, #tpu.memory_space<vmem>>, vector<8x16x128xf32>
    %cst_7 = arith.constant dense<0xFF800000> : vector<8x128xf32>
    %15 = vector.multi_reduction <maximumf>, %14, %cst_7 [1] : vector<8x16x128xf32> to vector<8x128xf32>
    %16 = vector.shape_cast %15 : vector<8x128xf32> to vector<8x1x128xf32>
    %17 = vector.broadcast %16 : vector<8x1x128xf32> to vector<8x16x128xf32>
    %18 = arith.subf %14, %17 : vector<8x16x128xf32>
    %19 = math.exp %18 : vector<8x16x128xf32>
    %cst_8 = arith.constant dense<0.000000e+00> : vector<8x128xf32>
    %20 = vector.multi_reduction <add>, %19, %cst_8 [1] : vector<8x16x128xf32> to vector<8x128xf32>
    %21 = vector.shape_cast %20 : vector<8x128xf32> to vector<8x1x128xf32>
    %22 = tpu.reciprocal %21 {approx = true} : vector<8x1x128xf32> -> vector<8x1x128xf32>
    %23 = vector.broadcast %22 : vector<8x1x128xf32> to vector<8x16x128xf32>
    %24 = arith.mulf %19, %23 : vector<8x16x128xf32>
    %c0_9 = arith.constant 0 : index
    %c0_10 = arith.constant 0 : index
    %c0_11 = arith.constant 0 : index
    %25 = vector.load %arg5[%c0_9, %c0_10, %c0_11] : memref<8x1x128xf32, #tpu.memory_space<vmem>>, vector<8x1x128xf32>
    %cst_12 = arith.constant 0.000000e+00 : f32
    %26 = vector.broadcast %cst_12 : f32 to vector<8x1x128xf32>
    %27 = arith.subf %26, %25 : vector<8x1x128xf32>
    %28 = math.exp %27 : vector<8x1x128xf32>
    %cst_13 = arith.constant 1.000000e+00 : f32
    %29 = vector.broadcast %cst_13 : f32 to vector<8x1x128xf32>
    %30 = arith.addf %29, %28 : vector<8x1x128xf32>
    %31 = tpu.reciprocal %30 {approx = true} : vector<8x1x128xf32> -> vector<8x1x128xf32>
    %32 = arith.mulf %13, %24 : vector<8x16x128xf32>
    %cst_14 = arith.constant dense<0.000000e+00> : vector<8x128xf32>
    %33 = vector.multi_reduction <add>, %32, %cst_14 [1] : vector<8x16x128xf32> to vector<8x128xf32>
    %34 = vector.shape_cast %33 : vector<8x128xf32> to vector<8x1x128xf32>
    %c0_15 = arith.constant 0 : index
    %c0_16 = arith.constant 0 : index
    %c0_17 = arith.constant 0 : index
    %35 = vector.load %arg4[%c0_15, %c0_16, %c0_17] : memref<8x1x128xf32, #tpu.memory_space<vmem>>, vector<8x1x128xf32>
    %c0_18 = arith.constant 0 : index
    %c0_19 = arith.constant 0 : index
    %36 = vector.load %arg7[%c0_18, %c0_19] : memref<16x128xf32, #tpu.memory_space<vmem>>, vector<16x128xf32>
    %37 = vector.extract_strided_slice %24 {offsets = [0, 0, 0], sizes = [1, 16, 128], strides = [1, 1, 1]} : vector<8x16x128xf32> to vector<1x16x128xf32>
    %38 = vector.shape_cast %37 : vector<1x16x128xf32> to vector<16x128xf32>
    %39 = vector.extract_strided_slice %13 {offsets = [0, 0, 0], sizes = [1, 16, 128], strides = [1, 1, 1]} : vector<8x16x128xf32> to vector<1x16x128xf32>
    %40 = vector.shape_cast %39 : vector<1x16x128xf32> to vector<16x128xf32>
    %41 = arith.mulf %36, %38 : vector<16x128xf32>
    %cst_20 = arith.constant dense<0.000000e+00> : vector<128xf32>
    %42 = vector.multi_reduction <add>, %41, %cst_20 [0] : vector<16x128xf32> to vector<128xf32>
    %43 = vector.shape_cast %42 : vector<128xf32> to vector<1x128xf32>
    %44 = arith.mulf %36, %40 : vector<16x128xf32>
    %cst_21 = arith.constant dense<0.000000e+00> : vector<128xf32>
    %45 = vector.multi_reduction <add>, %44, %cst_21 [0] : vector<16x128xf32> to vector<128xf32>
    %46 = vector.shape_cast %45 : vector<128xf32> to vector<1x128xf32>
    %47 = vector.extract_strided_slice %31 {offsets = [0, 0, 0], sizes = [1, 1, 128], strides = [1, 1, 1]} : vector<8x1x128xf32> to vector<1x1x128xf32>
    %48 = vector.shape_cast %47 : vector<1x1x128xf32> to vector<1x128xf32>
    %49 = vector.extract_strided_slice %35 {offsets = [0, 0, 0], sizes = [1, 1, 128], strides = [1, 1, 1]} : vector<8x1x128xf32> to vector<1x1x128xf32>
    %50 = vector.shape_cast %49 : vector<1x1x128xf32> to vector<1x128xf32>
    %51 = arith.subf %50, %43 : vector<1x128xf32>
    %52 = arith.mulf %48, %51 : vector<1x128xf32>
    %53 = vector.extract_strided_slice %34 {offsets = [0, 0, 0], sizes = [1, 1, 128], strides = [1, 1, 1]} : vector<8x1x128xf32> to vector<1x1x128xf32>
    %54 = vector.shape_cast %53 : vector<1x1x128xf32> to vector<1x128xf32>
    %55 = arith.mulf %52, %54 : vector<1x128xf32>
    %56 = arith.addf %46, %55 : vector<1x128xf32>
    %c0_22 = arith.constant 0 : index
    %c0_23 = arith.constant 0 : index
    %c0_24 = arith.constant 0 : index
    %57 = vector.load %arg6[%c0_22, %c0_23, %c0_24] : memref<8x1x128xf32, #tpu.memory_space<vmem>>, vector<1x1x128xf32>
    %58 = vector.shape_cast %57 : vector<1x1x128xf32> to vector<1x128xf32>
    %59 = vector.shape_cast %56 : vector<1x128xf32> to vector<1x1x128xf32>
    tpu.vector_store %arg6[%c0_22, %c0_23, %c0_24], %59 {strides = array<i32>} : memref<8x1x128xf32, #tpu.memory_space<vmem>>, vector<1x1x128xf32>,
    %60 = vector.broadcast %52 : vector<1x128xf32> to vector<16x128xf32>
    %61 = arith.mulf %38, %60 : vector<16x128xf32>
    %62 = arith.addf %36, %61 : vector<16x128xf32>
    %63 = vector.extract_strided_slice %24 {offsets = [1, 0, 0], sizes = [1, 16, 128], strides = [1, 1, 1]} : vector<8x16x128xf32> to vector<1x16x128xf32>
    %64 = vector.shape_cast %63 : vector<1x16x128xf32> to vector<16x128xf32>
    %65 = vector.extract_strided_slice %13 {offsets = [1, 0, 0], sizes = [1, 16, 128], strides = [1, 1, 1]} : vector<8x16x128xf32> to vector<1x16x128xf32>
    %66 = vector.shape_cast %65 : vector<1x16x128xf32> to vector<16x128xf32>
    %67 = arith.mulf %62, %64 : vector<16x128xf32>
    %cst_25 = arith.constant dense<0.000000e+00> : vector<128xf32>
    %68 = vector.multi_reduction <add>, %67, %cst_25 [0] : vector<16x128xf32> to vector<128xf32>
    %69 = vector.shape_cast %68 : vector<128xf32> to vector<1x128xf32>
    %70 = arith.mulf %62, %66 : vector<16x128xf32>
    %cst_26 = arith.constant dense<0.000000e+00> : vector<128xf32>
    %71 = vector.multi_reduction <add>, %70, %cst_26 [0] : vector<16x128xf32> to vector<128xf32>
    %72 = vector.shape_cast %71 : vector<128xf32> to vector<1x128xf32>
    %73 = vector.extract_strided_slice %31 {offsets = [1, 0, 0], sizes = [1, 1, 128], strides = [1, 1, 1]} : vector<8x1x128xf32> to vector<1x1x128xf32>
    %74 = vector.shape_cast %73 : vector<1x1x128xf32> to vector<1x128xf32>
    %75 = vector.extract_strided_slice %35 {offsets = [1, 0, 0], sizes = [1, 1, 128], strides = [1, 1, 1]} : vector<8x1x128xf32> to vector<1x1x128xf32>
    %76 = vector.shape_cast %75 : vector<1x1x128xf32> to vector<1x128xf32>
    %77 = arith.subf %76, %69 : vector<1x128xf32>
    %78 = arith.mulf %74, %77 : vector<1x128xf32>
    %79 = vector.extract_strided_slice %34 {offsets = [1, 0, 0], sizes = [1, 1, 128], strides = [1, 1, 1]} : vector<8x1x128xf32> to vector<1x1x128xf32>
    %80 = vector.shape_cast %79 : vector<1x1x128xf32> to vector<1x128xf32>
    %81 = arith.mulf %78, %80 : vector<1x128xf32>
    %82 = arith.addf %72, %81 : vector<1x128xf32>
    %c1 = arith.constant 1 : index
    %c0_27 = arith.constant 0 : index
    %c0_28 = arith.constant 0 : index
    %83 = vector.load %arg6[%c1, %c0_27, %c0_28] : memref<8x1x128xf32, #tpu.memory_space<vmem>>, vector<1x1x128xf32>
    %84 = vector.shape_cast %83 : vector<1x1x128xf32> to vector<1x128xf32>
    %85 = vector.shape_cast %82 : vector<1x128xf32> to vector<1x1x128xf32>
    tpu.vector_store %arg6[%c1, %c0_27, %c0_28], %85 {strides = array<i32>} : memref<8x1x128xf32, #tpu.memory_space<vmem>>, vector<1x1x128xf32>,
    %86 = vector.broadcast %78 : vector<1x128xf32> to vector<16x128xf32>
    %87 = arith.mulf %64, %86 : vector<16x128xf32>
    %88 = arith.addf %62, %87 : vector<16x128xf32>
    %89 = vector.extract_strided_slice %24 {offsets = [2, 0, 0], sizes = [1, 16, 128], strides = [1, 1, 1]} : vector<8x16x128xf32> to vector<1x16x128xf32>
    %90 = vector.shape_cast %89 : vector<1x16x128xf32> to vector<16x128xf32>
    %91 = vector.extract_strided_slice %13 {offsets = [2, 0, 0], sizes = [1, 16, 128], strides = [1, 1, 1]} : vector<8x16x128xf32> to vector<1x16x128xf32>
    %92 = vector.shape_cast %91 : vector<1x16x128xf32> to vector<16x128xf32>
    %93 = arith.mulf %88, %90 : vector<16x128xf32>
    %cst_29 = arith.constant dense<0.000000e+00> : vector<128xf32>
    %94 = vector.multi_reduction <add>, %93, %cst_29 [0] : vector<16x128xf32> to vector<128xf32>
    %95 = vector.shape_cast %94 : vector<128xf32> to vector<1x128xf32>
    %96 = arith.mulf %88, %92 : vector<16x128xf32>
    %cst_30 = arith.constant dense<0.000000e+00> : vector<128xf32>
    %97 = vector.multi_reduction <add>, %96, %cst_30 [0] : vector<16x128xf32> to vector<128xf32>
    %98 = vector.shape_cast %97 : vector<128xf32> to vector<1x128xf32>
    %99 = vector.extract_strided_slice %31 {offsets = [2, 0, 0], sizes = [1, 1, 128], strides = [1, 1, 1]} : vector<8x1x128xf32> to vector<1x1x128xf32>
    %100 = vector.shape_cast %99 : vector<1x1x128xf32> to vector<1x128xf32>
    %101 = vector.extract_strided_slice %35 {offsets = [2, 0, 0], sizes = [1, 1, 128], strides = [1, 1, 1]} : vector<8x1x128xf32> to vector<1x1x128xf32>
    %102 = vector.shape_cast %101 : vector<1x1x128xf32> to vector<1x128xf32>
    %103 = arith.subf %102, %95 : vector<1x128xf32>
    %104 = arith.mulf %100, %103 : vector<1x128xf32>
    %105 = vector.extract_strided_slice %34 {offsets = [2, 0, 0], sizes = [1, 1, 128], strides = [1, 1, 1]} : vector<8x1x128xf32> to vector<1x1x128xf32>
    %106 = vector.shape_cast %105 : vector<1x1x128xf32> to vector<1x128xf32>
    %107 = arith.mulf %104, %106 : vector<1x128xf32>
    %108 = arith.addf %98, %107 : vector<1x128xf32>
    %c2 = arith.constant 2 : index
    %c0_31 = arith.constant 0 : index
    %c0_32 = arith.constant 0 : index
    %109 = vector.load %arg6[%c2, %c0_31, %c0_32] : memref<8x1x128xf32, #tpu.memory_space<vmem>>, vector<1x1x128xf32>
    %110 = vector.shape_cast %109 : vector<1x1x128xf32> to vector<1x128xf32>
    %111 = vector.shape_cast %108 : vector<1x128xf32> to vector<1x1x128xf32>
    tpu.vector_store %arg6[%c2, %c0_31, %c0_32], %111 {strides = array<i32>} : memref<8x1x128xf32, #tpu.memory_space<vmem>>, vector<1x1x128xf32>,
    %112 = vector.broadcast %104 : vector<1x128xf32> to vector<16x128xf32>
    %113 = arith.mulf %90, %112 : vector<16x128xf32>
    %114 = arith.addf %88, %113 : vector<16x128xf32>
    %115 = vector.extract_strided_slice %24 {offsets = [3, 0, 0], sizes = [1, 16, 128], strides = [1, 1, 1]} : vector<8x16x128xf32> to vector<1x16x128xf32>
    %116 = vector.shape_cast %115 : vector<1x16x128xf32> to vector<16x128xf32>
    %117 = vector.extract_strided_slice %13 {offsets = [3, 0, 0], sizes = [1, 16, 128], strides = [1, 1, 1]} : vector<8x16x128xf32> to vector<1x16x128xf32>
    %118 = vector.shape_cast %117 : vector<1x16x128xf32> to vector<16x128xf32>
    %119 = arith.mulf %114, %116 : vector<16x128xf32>
    %cst_33 = arith.constant dense<0.000000e+00> : vector<128xf32>
    %120 = vector.multi_reduction <add>, %119, %cst_33 [0] : vector<16x128xf32> to vector<128xf32>
    %121 = vector.shape_cast %120 : vector<128xf32> to vector<1x128xf32>
    %122 = arith.mulf %114, %118 : vector<16x128xf32>
    %cst_34 = arith.constant dense<0.000000e+00> : vector<128xf32>
    %123 = vector.multi_reduction <add>, %122, %cst_34 [0] : vector<16x128xf32> to vector<128xf32>
    %124 = vector.shape_cast %123 : vector<128xf32> to vector<1x128xf32>
    %125 = vector.extract_strided_slice %31 {offsets = [3, 0, 0], sizes = [1, 1, 128], strides = [1, 1, 1]} : vector<8x1x128xf32> to vector<1x1x128xf32>
    %126 = vector.shape_cast %125 : vector<1x1x128xf32> to vector<1x128xf32>
    %127 = vector.extract_strided_slice %35 {offsets = [3, 0, 0], sizes = [1, 1, 128], strides = [1, 1, 1]} : vector<8x1x128xf32> to vector<1x1x128xf32>
    %128 = vector.shape_cast %127 : vector<1x1x128xf32> to vector<1x128xf32>
    %129 = arith.subf %128, %121 : vector<1x128xf32>
    %130 = arith.mulf %126, %129 : vector<1x128xf32>
    %131 = vector.extract_strided_slice %34 {offsets = [3, 0, 0], sizes = [1, 1, 128], strides = [1, 1, 1]} : vector<8x1x128xf32> to vector<1x1x128xf32>
    %132 = vector.shape_cast %131 : vector<1x1x128xf32> to vector<1x128xf32>
    %133 = arith.mulf %130, %132 : vector<1x128xf32>
    %134 = arith.addf %124, %133 : vector<1x128xf32>
    %c3 = arith.constant 3 : index
    %c0_35 = arith.constant 0 : index
    %c0_36 = arith.constant 0 : index
    %135 = vector.load %arg6[%c3, %c0_35, %c0_36] : memref<8x1x128xf32, #tpu.memory_space<vmem>>, vector<1x1x128xf32>
    %136 = vector.shape_cast %135 : vector<1x1x128xf32> to vector<1x128xf32>
    %137 = vector.shape_cast %134 : vector<1x128xf32> to vector<1x1x128xf32>
    tpu.vector_store %arg6[%c3, %c0_35, %c0_36], %137 {strides = array<i32>} : memref<8x1x128xf32, #tpu.memory_space<vmem>>, vector<1x1x128xf32>,
    %138 = vector.broadcast %130 : vector<1x128xf32> to vector<16x128xf32>
    %139 = arith.mulf %116, %138 : vector<16x128xf32>
    %140 = arith.addf %114, %139 : vector<16x128xf32>
    %141 = vector.extract_strided_slice %24 {offsets = [4, 0, 0], sizes = [1, 16, 128], strides = [1, 1, 1]} : vector<8x16x128xf32> to vector<1x16x128xf32>
    %142 = vector.shape_cast %141 : vector<1x16x128xf32> to vector<16x128xf32>
    %143 = vector.extract_strided_slice %13 {offsets = [4, 0, 0], sizes = [1, 16, 128], strides = [1, 1, 1]} : vector<8x16x128xf32> to vector<1x16x128xf32>
    %144 = vector.shape_cast %143 : vector<1x16x128xf32> to vector<16x128xf32>
    %145 = arith.mulf %140, %142 : vector<16x128xf32>
    %cst_37 = arith.constant dense<0.000000e+00> : vector<128xf32>
    %146 = vector.multi_reduction <add>, %145, %cst_37 [0] : vector<16x128xf32> to vector<128xf32>
    %147 = vector.shape_cast %146 : vector<128xf32> to vector<1x128xf32>
    %148 = arith.mulf %140, %144 : vector<16x128xf32>
    %cst_38 = arith.constant dense<0.000000e+00> : vector<128xf32>
    %149 = vector.multi_reduction <add>, %148, %cst_38 [0] : vector<16x128xf32> to vector<128xf32>
    %150 = vector.shape_cast %149 : vector<128xf32> to vector<1x128xf32>
    %151 = vector.extract_strided_slice %31 {offsets = [4, 0, 0], sizes = [1, 1, 128], strides = [1, 1, 1]} : vector<8x1x128xf32> to vector<1x1x128xf32>
    %152 = vector.shape_cast %151 : vector<1x1x128xf32> to vector<1x128xf32>
    %153 = vector.extract_strided_slice %35 {offsets = [4, 0, 0], sizes = [1, 1, 128], strides = [1, 1, 1]} : vector<8x1x128xf32> to vector<1x1x128xf32>
    %154 = vector.shape_cast %153 : vector<1x1x128xf32> to vector<1x128xf32>
    %155 = arith.subf %154, %147 : vector<1x128xf32>
    %156 = arith.mulf %152, %155 : vector<1x128xf32>
    %157 = vector.extract_strided_slice %34 {offsets = [4, 0, 0], sizes = [1, 1, 128], strides = [1, 1, 1]} : vector<8x1x128xf32> to vector<1x1x128xf32>
    %158 = vector.shape_cast %157 : vector<1x1x128xf32> to vector<1x128xf32>
    %159 = arith.mulf %156, %158 : vector<1x128xf32>
    %160 = arith.addf %150, %159 : vector<1x128xf32>
    %c4 = arith.constant 4 : index
    %c0_39 = arith.constant 0 : index
    %c0_40 = arith.constant 0 : index
    %161 = vector.load %arg6[%c4, %c0_39, %c0_40] : memref<8x1x128xf32, #tpu.memory_space<vmem>>, vector<1x1x128xf32>
    %162 = vector.shape_cast %161 : vector<1x1x128xf32> to vector<1x128xf32>
    %163 = vector.shape_cast %160 : vector<1x128xf32> to vector<1x1x128xf32>
    tpu.vector_store %arg6[%c4, %c0_39, %c0_40], %163 {strides = array<i32>} : memref<8x1x128xf32, #tpu.memory_space<vmem>>, vector<1x1x128xf32>,
    %164 = vector.broadcast %156 : vector<1x128xf32> to vector<16x128xf32>
    %165 = arith.mulf %142, %164 : vector<16x128xf32>
    %166 = arith.addf %140, %165 : vector<16x128xf32>
    %167 = vector.extract_strided_slice %24 {offsets = [5, 0, 0], sizes = [1, 16, 128], strides = [1, 1, 1]} : vector<8x16x128xf32> to vector<1x16x128xf32>
    %168 = vector.shape_cast %167 : vector<1x16x128xf32> to vector<16x128xf32>
    %169 = vector.extract_strided_slice %13 {offsets = [5, 0, 0], sizes = [1, 16, 128], strides = [1, 1, 1]} : vector<8x16x128xf32> to vector<1x16x128xf32>
    %170 = vector.shape_cast %169 : vector<1x16x128xf32> to vector<16x128xf32>
    %171 = arith.mulf %166, %168 : vector<16x128xf32>
    %cst_41 = arith.constant dense<0.000000e+00> : vector<128xf32>
    %172 = vector.multi_reduction <add>, %171, %cst_41 [0] : vector<16x128xf32> to vector<128xf32>
    %173 = vector.shape_cast %172 : vector<128xf32> to vector<1x128xf32>
    %174 = arith.mulf %166, %170 : vector<16x128xf32>
    %cst_42 = arith.constant dense<0.000000e+00> : vector<128xf32>
    %175 = vector.multi_reduction <add>, %174, %cst_42 [0] : vector<16x128xf32> to vector<128xf32>
    %176 = vector.shape_cast %175 : vector<128xf32> to vector<1x128xf32>
    %177 = vector.extract_strided_slice %31 {offsets = [5, 0, 0], sizes = [1, 1, 128], strides = [1, 1, 1]} : vector<8x1x128xf32> to vector<1x1x128xf32>
    %178 = vector.shape_cast %177 : vector<1x1x128xf32> to vector<1x128xf32>
    %179 = vector.extract_strided_slice %35 {offsets = [5, 0, 0], sizes = [1, 1, 128], strides = [1, 1, 1]} : vector<8x1x128xf32> to vector<1x1x128xf32>
    %180 = vector.shape_cast %179 : vector<1x1x128xf32> to vector<1x128xf32>
    %181 = arith.subf %180, %173 : vector<1x128xf32>
    %182 = arith.mulf %178, %181 : vector<1x128xf32>
    %183 = vector.extract_strided_slice %34 {offsets = [5, 0, 0], sizes = [1, 1, 128], strides = [1, 1, 1]} : vector<8x1x128xf32> to vector<1x1x128xf32>
    %184 = vector.shape_cast %183 : vector<1x1x128xf32> to vector<1x128xf32>
    %185 = arith.mulf %182, %184 : vector<1x128xf32>
    %186 = arith.addf %176, %185 : vector<1x128xf32>
    %c5 = arith.constant 5 : index
    %c0_43 = arith.constant 0 : index
    %c0_44 = arith.constant 0 : index
    %187 = vector.load %arg6[%c5, %c0_43, %c0_44] : memref<8x1x128xf32, #tpu.memory_space<vmem>>, vector<1x1x128xf32>
    %188 = vector.shape_cast %187 : vector<1x1x128xf32> to vector<1x128xf32>
    %189 = vector.shape_cast %186 : vector<1x128xf32> to vector<1x1x128xf32>
    tpu.vector_store %arg6[%c5, %c0_43, %c0_44], %189 {strides = array<i32>} : memref<8x1x128xf32, #tpu.memory_space<vmem>>, vector<1x1x128xf32>,
    %190 = vector.broadcast %182 : vector<1x128xf32> to vector<16x128xf32>
    %191 = arith.mulf %168, %190 : vector<16x128xf32>
    %192 = arith.addf %166, %191 : vector<16x128xf32>
    %193 = vector.extract_strided_slice %24 {offsets = [6, 0, 0], sizes = [1, 16, 128], strides = [1, 1, 1]} : vector<8x16x128xf32> to vector<1x16x128xf32>
    %194 = vector.shape_cast %193 : vector<1x16x128xf32> to vector<16x128xf32>
    %195 = vector.extract_strided_slice %13 {offsets = [6, 0, 0], sizes = [1, 16, 128], strides = [1, 1, 1]} : vector<8x16x128xf32> to vector<1x16x128xf32>
    %196 = vector.shape_cast %195 : vector<1x16x128xf32> to vector<16x128xf32>
    %197 = arith.mulf %192, %194 : vector<16x128xf32>
    %cst_45 = arith.constant dense<0.000000e+00> : vector<128xf32>
    %198 = vector.multi_reduction <add>, %197, %cst_45 [0] : vector<16x128xf32> to vector<128xf32>
    %199 = vector.shape_cast %198 : vector<128xf32> to vector<1x128xf32>
    %200 = arith.mulf %192, %196 : vector<16x128xf32>
    %cst_46 = arith.constant dense<0.000000e+00> : vector<128xf32>
    %201 = vector.multi_reduction <add>, %200, %cst_46 [0] : vector<16x128xf32> to vector<128xf32>
    %202 = vector.shape_cast %201 : vector<128xf32> to vector<1x128xf32>
    %203 = vector.extract_strided_slice %31 {offsets = [6, 0, 0], sizes = [1, 1, 128], strides = [1, 1, 1]} : vector<8x1x128xf32> to vector<1x1x128xf32>
    %204 = vector.shape_cast %203 : vector<1x1x128xf32> to vector<1x128xf32>
    %205 = vector.extract_strided_slice %35 {offsets = [6, 0, 0], sizes = [1, 1, 128], strides = [1, 1, 1]} : vector<8x1x128xf32> to vector<1x1x128xf32>
    %206 = vector.shape_cast %205 : vector<1x1x128xf32> to vector<1x128xf32>
    %207 = arith.subf %206, %199 : vector<1x128xf32>
    %208 = arith.mulf %204, %207 : vector<1x128xf32>
    %209 = vector.extract_strided_slice %34 {offsets = [6, 0, 0], sizes = [1, 1, 128], strides = [1, 1, 1]} : vector<8x1x128xf32> to vector<1x1x128xf32>
    %210 = vector.shape_cast %209 : vector<1x1x128xf32> to vector<1x128xf32>
    %211 = arith.mulf %208, %210 : vector<1x128xf32>
    %212 = arith.addf %202, %211 : vector<1x128xf32>
    %c6 = arith.constant 6 : index
    %c0_47 = arith.constant 0 : index
    %c0_48 = arith.constant 0 : index
    %213 = vector.load %arg6[%c6, %c0_47, %c0_48] : memref<8x1x128xf32, #tpu.memory_space<vmem>>, vector<1x1x128xf32>
    %214 = vector.shape_cast %213 : vector<1x1x128xf32> to vector<1x128xf32>
    %215 = vector.shape_cast %212 : vector<1x128xf32> to vector<1x1x128xf32>
    tpu.vector_store %arg6[%c6, %c0_47, %c0_48], %215 {strides = array<i32>} : memref<8x1x128xf32, #tpu.memory_space<vmem>>, vector<1x1x128xf32>,
    %216 = vector.broadcast %208 : vector<1x128xf32> to vector<16x128xf32>
    %217 = arith.mulf %194, %216 : vector<16x128xf32>
    %218 = arith.addf %192, %217 : vector<16x128xf32>
    %219 = vector.extract_strided_slice %24 {offsets = [7, 0, 0], sizes = [1, 16, 128], strides = [1, 1, 1]} : vector<8x16x128xf32> to vector<1x16x128xf32>
    %220 = vector.shape_cast %219 : vector<1x16x128xf32> to vector<16x128xf32>
    %221 = vector.extract_strided_slice %13 {offsets = [7, 0, 0], sizes = [1, 16, 128], strides = [1, 1, 1]} : vector<8x16x128xf32> to vector<1x16x128xf32>
    %222 = vector.shape_cast %221 : vector<1x16x128xf32> to vector<16x128xf32>
    %223 = arith.mulf %218, %220 : vector<16x128xf32>
    %cst_49 = arith.constant dense<0.000000e+00> : vector<128xf32>
    %224 = vector.multi_reduction <add>, %223, %cst_49 [0] : vector<16x128xf32> to vector<128xf32>
    %225 = vector.shape_cast %224 : vector<128xf32> to vector<1x128xf32>
    %226 = arith.mulf %218, %222 : vector<16x128xf32>
    %cst_50 = arith.constant dense<0.000000e+00> : vector<128xf32>
    %227 = vector.multi_reduction <add>, %226, %cst_50 [0] : vector<16x128xf32> to vector<128xf32>
    %228 = vector.shape_cast %227 : vector<128xf32> to vector<1x128xf32>
    %229 = vector.extract_strided_slice %31 {offsets = [7, 0, 0], sizes = [1, 1, 128], strides = [1, 1, 1]} : vector<8x1x128xf32> to vector<1x1x128xf32>
    %230 = vector.shape_cast %229 : vector<1x1x128xf32> to vector<1x128xf32>
    %231 = vector.extract_strided_slice %35 {offsets = [7, 0, 0], sizes = [1, 1, 128], strides = [1, 1, 1]} : vector<8x1x128xf32> to vector<1x1x128xf32>
    %232 = vector.shape_cast %231 : vector<1x1x128xf32> to vector<1x128xf32>
    %233 = arith.subf %232, %225 : vector<1x128xf32>
    %234 = arith.mulf %230, %233 : vector<1x128xf32>
    %235 = vector.extract_strided_slice %34 {offsets = [7, 0, 0], sizes = [1, 1, 128], strides = [1, 1, 1]} : vector<8x1x128xf32> to vector<1x1x128xf32>
    %236 = vector.shape_cast %235 : vector<1x1x128xf32> to vector<1x128xf32>
    %237 = arith.mulf %234, %236 : vector<1x128xf32>
    %238 = arith.addf %228, %237 : vector<1x128xf32>
    %c7 = arith.constant 7 : index
    %c0_51 = arith.constant 0 : index
    %c0_52 = arith.constant 0 : index
    %239 = vector.load %arg6[%c7, %c0_51, %c0_52] : memref<8x1x128xf32, #tpu.memory_space<vmem>>, vector<1x1x128xf32>
    %240 = vector.shape_cast %239 : vector<1x1x128xf32> to vector<1x128xf32>
    %241 = vector.shape_cast %238 : vector<1x128xf32> to vector<1x1x128xf32>
    tpu.vector_store %arg6[%c7, %c0_51, %c0_52], %241 {strides = array<i32>} : memref<8x1x128xf32, #tpu.memory_space<vmem>>, vector<1x1x128xf32>,
    %242 = vector.broadcast %234 : vector<1x128xf32> to vector<16x128xf32>
    %243 = arith.mulf %220, %242 : vector<16x128xf32>
    %244 = arith.addf %218, %243 : vector<16x128xf32>
    %c0_53 = arith.constant 0 : index
    %c0_54 = arith.constant 0 : index
    %245 = vector.load %arg7[%c0_53, %c0_54] : memref<16x128xf32, #tpu.memory_space<vmem>>, vector<16x128xf32>
    tpu.vector_store %arg7[%c0_53, %c0_54], %244 {strides = array<i32>} : memref<16x128xf32, #tpu.memory_space<vmem>>, vector<16x128xf32>,
    return
  }
  func.func @transform_0(%arg0: i32, %arg1: i32) -> (i32, i32, i32) {
    %c0_i32 = arith.constant 0 : i32
    %c0_i32_0 = arith.constant 0 : i32
    return %arg1, %c0_i32, %arg0 : i32, i32, i32
  }
  func.func @transform_1(%arg0: i32, %arg1: i32) -> (i32, i32, i32) {
    %c0_i32 = arith.constant 0 : i32
    %c0_i32_0 = arith.constant 0 : i32
    return %arg1, %c0_i32, %arg0 : i32, i32, i32
  }
  func.func @transform_2(%arg0: i32, %arg1: i32) -> (i32, i32, i32) {
    %c0_i32 = arith.constant 0 : i32
    %c0_i32_0 = arith.constant 0 : i32
    return %arg1, %c0_i32, %arg0 : i32, i32, i32
  }
  func.func @transform_3(%arg0: i32, %arg1: i32) -> (i32, i32, i32) {
    %c0_i32 = arith.constant 0 : i32
    %c0_i32_0 = arith.constant 0 : i32
    return %arg1, %c0_i32, %arg0 : i32, i32, i32
  }
  func.func @transform_4(%arg0: i32, %arg1: i32) -> (i32, i32, i32) {
    %c0_i32 = arith.constant 0 : i32
    %c0_i32_0 = arith.constant 0 : i32
    return %arg1, %c0_i32, %arg0 : i32, i32, i32
  }
}

module attributes {stable_mosaic.version = 11 : i64} {
  func.func @_linear_kernel(%arg0: i32, %arg1: memref<16x64xf32, #tpu.memory_space<vmem>>, %arg2: memref<64x128xf32, #tpu.memory_space<vmem>>, %arg3: memref<1x128xf32, #tpu.memory_space<vmem>>, %arg4: memref<16x128xf32, #tpu.memory_space<vmem>>) attributes {dimension_semantics = [#tpu.dimension_semantics<parallel>], iteration_bounds = array<i64: 1>, scalar_prefetch = 0 : i64, scratch_operands = 0 : i64, tpu.core_type = #tpu.core_type<tc>, window_params = [{transform_indices = @transform_0, window_bounds = array<i64: 16, 64>}, {pipeline_mode = #tpu.pipeline_mode<synchronous>, transform_indices = @transform_1, window_bounds = array<i64: 64, 128>}, {pipeline_mode = #tpu.pipeline_mode<synchronous>, transform_indices = @transform_2, window_bounds = array<i64: 1, 128>}, {transform_indices = @transform_3, window_bounds = array<i64: 16, 128>}]} {
    %c0 = arith.constant 0 : index
    %c0_0 = arith.constant 0 : index
    %0 = vector.load %arg1[%c0, %c0_0] : memref<16x64xf32, #tpu.memory_space<vmem>>, vector<16x64xf32>
    %c0_1 = arith.constant 0 : index
    %c0_2 = arith.constant 0 : index
    %1 = vector.load %arg2[%c0_1, %c0_2] : memref<64x128xf32, #tpu.memory_space<vmem>>, vector<64x128xf32>
    %2 = arith.truncf %0 : vector<16x64xf32> to vector<16x64xbf16>
    %3 = arith.truncf %1 : vector<64x128xf32> to vector<64x128xbf16>
    %cst = arith.constant dense<0.000000e+00> : vector<16x128xf32>
    %4 = tpu.matmul %2, %3, %cst {dimension_numbers = #tpu.dot_dimension_numbers<[1], [0], [0], [1], [0, 0, 1, 1], [], []>} : vector<16x64xbf16>, vector<64x128xbf16>, vector<16x128xf32> -> vector<16x128xf32>
    %c0_3 = arith.constant 0 : index
    %c0_4 = arith.constant 0 : index
    %5 = vector.load %arg3[%c0_3, %c0_4] : memref<1x128xf32, #tpu.memory_space<vmem>>, vector<1x128xf32>
    %6 = vector.broadcast %5 : vector<1x128xf32> to vector<16x128xf32>
    %7 = arith.addf %4, %6 : vector<16x128xf32>
    %c0_5 = arith.constant 0 : index
    %c0_6 = arith.constant 0 : index
    %8 = vector.load %arg4[%c0_5, %c0_6] : memref<16x128xf32, #tpu.memory_space<vmem>>, vector<16x128xf32>
    tpu.vector_store %arg4[%c0_5, %c0_6], %7 {strides = array<i32>} : memref<16x128xf32, #tpu.memory_space<vmem>>, vector<16x128xf32>,
    return
  }
  func.func @transform_0(%arg0: i32) -> (i32, i32) {
    %c0_i32 = arith.constant 0 : i32
    %c0_i32_0 = arith.constant 0 : i32
    return %arg0, %c0_i32 : i32, i32
  }
  func.func @transform_1(%arg0: i32) -> (i32, i32) {
    %c0_i32 = arith.constant 0 : i32
    %c0_i32_0 = arith.constant 0 : i32
    %c0_i32_1 = arith.constant 0 : i32
    return %c0_i32, %c0_i32_0 : i32, i32
  }
  func.func @transform_2(%arg0: i32) -> (i32, i32) {
    %c0_i32 = arith.constant 0 : i32
    %c0_i32_0 = arith.constant 0 : i32
    %c0_i32_1 = arith.constant 0 : i32
    return %c0_i32, %c0_i32_0 : i32, i32
  }
  func.func @transform_3(%arg0: i32) -> (i32, i32) {
    %c0_i32 = arith.constant 0 : i32
    %c0_i32_0 = arith.constant 0 : i32
    return %arg0, %c0_i32 : i32, i32
  }
}

module attributes {stable_mosaic.version = 11 : i64} {
  func.func @_outproj_ffn_kernel(%arg0: i32, %arg1: memref<16x64xf32, #tpu.memory_space<vmem>>, %arg2: memref<16x64xf32, #tpu.memory_space<vmem>>, %arg3: memref<64x64xf32, #tpu.memory_space<vmem>>, %arg4: memref<1x64xf32, #tpu.memory_space<vmem>>, %arg5: memref<1x64xf32, #tpu.memory_space<vmem>>, %arg6: memref<64x128xf32, #tpu.memory_space<vmem>>, %arg7: memref<1x128xf32, #tpu.memory_space<vmem>>, %arg8: memref<128x64xf32, #tpu.memory_space<vmem>>, %arg9: memref<1x64xf32, #tpu.memory_space<vmem>>, %arg10: memref<16x64xf32, #tpu.memory_space<vmem>>) attributes {dimension_semantics = [#tpu.dimension_semantics<parallel>], iteration_bounds = array<i64: 1>, scalar_prefetch = 0 : i64, scratch_operands = 0 : i64, tpu.core_type = #tpu.core_type<tc>, window_params = [{transform_indices = @transform_0, window_bounds = array<i64: 16, 64>}, {transform_indices = @transform_1, window_bounds = array<i64: 16, 64>}, {pipeline_mode = #tpu.pipeline_mode<synchronous>, transform_indices = @transform_2, window_bounds = array<i64: 64, 64>}, {pipeline_mode = #tpu.pipeline_mode<synchronous>, transform_indices = @transform_3, window_bounds = array<i64: 1, 64>}, {pipeline_mode = #tpu.pipeline_mode<synchronous>, transform_indices = @transform_4, window_bounds = array<i64: 1, 64>}, {pipeline_mode = #tpu.pipeline_mode<synchronous>, transform_indices = @transform_5, window_bounds = array<i64: 64, 128>}, {pipeline_mode = #tpu.pipeline_mode<synchronous>, transform_indices = @transform_6, window_bounds = array<i64: 1, 128>}, {pipeline_mode = #tpu.pipeline_mode<synchronous>, transform_indices = @transform_7, window_bounds = array<i64: 128, 64>}, {pipeline_mode = #tpu.pipeline_mode<synchronous>, transform_indices = @transform_8, window_bounds = array<i64: 1, 64>}, {transform_indices = @transform_9, window_bounds = array<i64: 16, 64>}]} {
    %c0 = arith.constant 0 : index
    %c0_0 = arith.constant 0 : index
    %0 = vector.load %arg1[%c0, %c0_0] : memref<16x64xf32, #tpu.memory_space<vmem>>, vector<16x64xf32>
    %c0_1 = arith.constant 0 : index
    %c0_2 = arith.constant 0 : index
    %1 = vector.load %arg3[%c0_1, %c0_2] : memref<64x64xf32, #tpu.memory_space<vmem>>, vector<64x64xf32>
    %2 = arith.truncf %0 : vector<16x64xf32> to vector<16x64xbf16>
    %3 = arith.truncf %1 : vector<64x64xf32> to vector<64x64xbf16>
    %cst = arith.constant dense<0.000000e+00> : vector<16x64xf32>
    %4 = tpu.matmul %2, %3, %cst {dimension_numbers = #tpu.dot_dimension_numbers<[1], [0], [0], [1], [0, 0, 1, 1], [], []>} : vector<16x64xbf16>, vector<64x64xbf16>, vector<16x64xf32> -> vector<16x64xf32>
    %c0_3 = arith.constant 0 : index
    %c0_4 = arith.constant 0 : index
    %5 = vector.load %arg2[%c0_3, %c0_4] : memref<16x64xf32, #tpu.memory_space<vmem>>, vector<16x64xf32>
    %6 = arith.addf %4, %5 : vector<16x64xf32>
    %c0_5 = arith.constant 0 : index
    %c0_6 = arith.constant 0 : index
    %7 = vector.load %arg4[%c0_5, %c0_6] : memref<1x64xf32, #tpu.memory_space<vmem>>, vector<1x64xf32>
    %c0_7 = arith.constant 0 : index
    %c0_8 = arith.constant 0 : index
    %8 = vector.load %arg5[%c0_7, %c0_8] : memref<1x64xf32, #tpu.memory_space<vmem>>, vector<1x64xf32>
    %cst_9 = arith.constant dense<0.000000e+00> : vector<16xf32>
    %9 = vector.multi_reduction <add>, %6, %cst_9 [1] : vector<16x64xf32> to vector<16xf32>
    %10 = vector.shape_cast %9 : vector<16xf32> to vector<16x1xf32>
    %cst_10 = arith.constant 6.400000e+01 : f32
    %11 = vector.broadcast %cst_10 : f32 to vector<16x1xf32>
    %12 = arith.divf %10, %11 : vector<16x1xf32>
    %13 = vector.broadcast %12 : vector<16x1xf32> to vector<16x64xf32>
    %14 = arith.subf %6, %13 : vector<16x64xf32>
    %15 = arith.mulf %14, %14 : vector<16x64xf32>
    %cst_11 = arith.constant dense<0.000000e+00> : vector<16xf32>
    %16 = vector.multi_reduction <add>, %15, %cst_11 [1] : vector<16x64xf32> to vector<16xf32>
    %17 = vector.shape_cast %16 : vector<16xf32> to vector<16x1xf32>
    %cst_12 = arith.constant 6.400000e+01 : f32
    %18 = vector.broadcast %cst_12 : f32 to vector<16x1xf32>
    %19 = arith.divf %17, %18 : vector<16x1xf32>
    %20 = vector.broadcast %12 : vector<16x1xf32> to vector<16x64xf32>
    %21 = arith.subf %6, %20 : vector<16x64xf32>
    %cst_13 = arith.constant 9.99999974E-6 : f32
    %22 = vector.broadcast %cst_13 : f32 to vector<16x1xf32>
    %23 = arith.addf %19, %22 : vector<16x1xf32>
    %24 = math.rsqrt %23 : vector<16x1xf32>
    %25 = vector.broadcast %24 : vector<16x1xf32> to vector<16x64xf32>
    %26 = arith.mulf %21, %25 : vector<16x64xf32>
    %27 = vector.broadcast %7 : vector<1x64xf32> to vector<16x64xf32>
    %28 = arith.mulf %26, %27 : vector<16x64xf32>
    %29 = vector.broadcast %8 : vector<1x64xf32> to vector<16x64xf32>
    %30 = arith.addf %28, %29 : vector<16x64xf32>
    %c0_14 = arith.constant 0 : index
    %c0_15 = arith.constant 0 : index
    %31 = vector.load %arg6[%c0_14, %c0_15] : memref<64x128xf32, #tpu.memory_space<vmem>>, vector<64x128xf32>
    %32 = arith.truncf %30 : vector<16x64xf32> to vector<16x64xbf16>
    %33 = arith.truncf %31 : vector<64x128xf32> to vector<64x128xbf16>
    %cst_16 = arith.constant dense<0.000000e+00> : vector<16x128xf32>
    %34 = tpu.matmul %32, %33, %cst_16 {dimension_numbers = #tpu.dot_dimension_numbers<[1], [0], [0], [1], [0, 0, 1, 1], [], []>} : vector<16x64xbf16>, vector<64x128xbf16>, vector<16x128xf32> -> vector<16x128xf32>
    %c0_17 = arith.constant 0 : index
    %c0_18 = arith.constant 0 : index
    %35 = vector.load %arg7[%c0_17, %c0_18] : memref<1x128xf32, #tpu.memory_space<vmem>>, vector<1x128xf32>
    %36 = vector.broadcast %35 : vector<1x128xf32> to vector<16x128xf32>
    %37 = arith.addf %34, %36 : vector<16x128xf32>
    %cst_19 = arith.constant 0.000000e+00 : f32
    %38 = vector.broadcast %cst_19 : f32 to vector<16x128xf32>
    %39 = arith.maximumf %37, %38 : vector<16x128xf32>
    %c0_20 = arith.constant 0 : index
    %c0_21 = arith.constant 0 : index
    %40 = vector.load %arg8[%c0_20, %c0_21] : memref<128x64xf32, #tpu.memory_space<vmem>>, vector<128x64xf32>
    %41 = arith.truncf %39 : vector<16x128xf32> to vector<16x128xbf16>
    %42 = arith.truncf %40 : vector<128x64xf32> to vector<128x64xbf16>
    %cst_22 = arith.constant dense<0.000000e+00> : vector<16x64xf32>
    %43 = tpu.matmul %41, %42, %cst_22 {dimension_numbers = #tpu.dot_dimension_numbers<[1], [0], [0], [1], [0, 0, 1, 1], [], []>} : vector<16x128xbf16>, vector<128x64xbf16>, vector<16x64xf32> -> vector<16x64xf32>
    %c0_23 = arith.constant 0 : index
    %c0_24 = arith.constant 0 : index
    %44 = vector.load %arg9[%c0_23, %c0_24] : memref<1x64xf32, #tpu.memory_space<vmem>>, vector<1x64xf32>
    %45 = vector.broadcast %44 : vector<1x64xf32> to vector<16x64xf32>
    %46 = arith.addf %43, %45 : vector<16x64xf32>
    %47 = arith.addf %46, %6 : vector<16x64xf32>
    %c0_25 = arith.constant 0 : index
    %c0_26 = arith.constant 0 : index
    %48 = vector.load %arg10[%c0_25, %c0_26] : memref<16x64xf32, #tpu.memory_space<vmem>>, vector<16x64xf32>
    tpu.vector_store %arg10[%c0_25, %c0_26], %47 {strides = array<i32>} : memref<16x64xf32, #tpu.memory_space<vmem>>, vector<16x64xf32>,
    return
  }
  func.func @transform_0(%arg0: i32) -> (i32, i32) {
    %c0_i32 = arith.constant 0 : i32
    %c0_i32_0 = arith.constant 0 : i32
    return %arg0, %c0_i32 : i32, i32
  }
  func.func @transform_1(%arg0: i32) -> (i32, i32) {
    %c0_i32 = arith.constant 0 : i32
    %c0_i32_0 = arith.constant 0 : i32
    return %arg0, %c0_i32 : i32, i32
  }
  func.func @transform_2(%arg0: i32) -> (i32, i32) {
    %c0_i32 = arith.constant 0 : i32
    %c0_i32_0 = arith.constant 0 : i32
    %c0_i32_1 = arith.constant 0 : i32
    return %c0_i32, %c0_i32_0 : i32, i32
  }
  func.func @transform_3(%arg0: i32) -> (i32, i32) {
    %c0_i32 = arith.constant 0 : i32
    %c0_i32_0 = arith.constant 0 : i32
    %c0_i32_1 = arith.constant 0 : i32
    return %c0_i32, %c0_i32_0 : i32, i32
  }
  func.func @transform_4(%arg0: i32) -> (i32, i32) {
    %c0_i32 = arith.constant 0 : i32
    %c0_i32_0 = arith.constant 0 : i32
    %c0_i32_1 = arith.constant 0 : i32
    return %c0_i32, %c0_i32_0 : i32, i32
  }
  func.func @transform_5(%arg0: i32) -> (i32, i32) {
    %c0_i32 = arith.constant 0 : i32
    %c0_i32_0 = arith.constant 0 : i32
    %c0_i32_1 = arith.constant 0 : i32
    return %c0_i32, %c0_i32_0 : i32, i32
  }
  func.func @transform_6(%arg0: i32) -> (i32, i32) {
    %c0_i32 = arith.constant 0 : i32
    %c0_i32_0 = arith.constant 0 : i32
    %c0_i32_1 = arith.constant 0 : i32
    return %c0_i32, %c0_i32_0 : i32, i32
  }
  func.func @transform_7(%arg0: i32) -> (i32, i32) {
    %c0_i32 = arith.constant 0 : i32
    %c0_i32_0 = arith.constant 0 : i32
    %c0_i32_1 = arith.constant 0 : i32
    return %c0_i32, %c0_i32_0 : i32, i32
  }
  func.func @transform_8(%arg0: i32) -> (i32, i32) {
    %c0_i32 = arith.constant 0 : i32
    %c0_i32_0 = arith.constant 0 : i32
    %c0_i32_1 = arith.constant 0 : i32
    return %c0_i32, %c0_i32_0 : i32, i32
  }
  func.func @transform_9(%arg0: i32) -> (i32, i32) {
    %c0_i32 = arith.constant 0 : i32
    %c0_i32_0 = arith.constant 0 : i32
    return %arg0, %c0_i32 : i32, i32
  }
}

</mosaic_0001>

<llo_original>
// kernel: _lambda_.9
$region0: #{_lambda_.9}
  #allocation0 [shape = 'u32[]', space=smem, size = 0x4, offset = 0x4, fixed_abs, tag = 'smem constant byte address 0x4 - core index']
  #allocation1 [shape = 'u32[144,128]{1,0:T(1,128)}', space=vmem, size = 0x12000, scoped, tag = 'internal scratch']
  %s0 = inlined_call_operand.vmem [shape: f32[16,64], index: 0, kind: input, shape index: {}]
  %s1 = inlined_call_operand.vmem [shape: f32[1,64], index: 1, kind: input, shape index: {}]
  %s2 = inlined_call_operand.vmem [shape: f32[1,64], index: 2, kind: input, shape index: {}]
  %s3 = inlined_call_operand.vmem [shape: f32[64,256], index: 3, kind: input, shape index: {}]
  %s4 = inlined_call_operand.vmem [shape: f32[16,256], index: 4, kind: output, shape index: {}]
  %s5 = sld [smem:[#allocation0]]
  $region26: #{_lambda_.9} parent=0
    _
  %s7 = ssub.s32 1, %s5
  %s8 = scalar_select 0, %s7, %s5
  // Predicated region
  $region2: #{_lambda_.9} parent=0 // pred_check
    _
  $region3: #{_lambda_.9} parent=0 // pred_check_branch
    %10 = sbr.rel (0) target = $region5
  $region4: #{_lambda_.9} parent=0 // pred_region
    _
  $region5: #{_lambda_.9} parent=0 // pred_fallthru
    _
  // Predicated region
  $region6: #{_lambda_.9} parent=0 // pred_check
    _
  $region7: #{_lambda_.9} parent=0 // pred_check_branch
    %12 = sbr.rel (0) target = $region9
  $region8: #{_lambda_.9} parent=0 // pred_region
    _
  $region9: #{_lambda_.9} parent=0 // pred_fallthru
    _
  // Predicated region
  $region10: #{_lambda_.9} parent=0 // pred_check
    _
  $region11: #{_lambda_.9} parent=0 // pred_check_branch
    %14 = sbr.rel (0) target = $region13
  $region12: #{_lambda_.9} parent=0 // pred_region
    _
  $region13: #{_lambda_.9} parent=0 // pred_fallthru
    _
  // Predicated region
  $region14: #{_lambda_.9} parent=0 // pred_check
    _
  $region15: #{_lambda_.9} parent=0 // pred_check_branch
    %16 = sbr.rel (0) target = $region17
  $region16: #{_lambda_.9} parent=0 // pred_region
    _
  $region17: #{_lambda_.9} parent=0 // pred_fallthru
    _
  %v18 = vld [vmem:[%s0] sm:$0xff]
  %v19 = vld [vmem:[%s0 + $0x8] sm:$0xff]
  %v20 = vld [vmem:[%s1] sm:$0x1]
  %v21 = vld [vmem:[%s2] sm:$0x1]
  %vm22 = vcmask 523264
  %v23 = vsel %vm22, %v18, 0.0
  %24 = vadd.xlane.f32.xlu0 %v23
  %v25 = vpop.xlane.xlu0 %24
  %v26 = vsel %vm22, %v19, 0.0
  %27 = vadd.xlane.f32.xlu0 %v26
  %v28 = vpop.xlane.xlu0 %27
  %v29 = vrcp.pop 64.0
  %v30 = vmul.f32 %v25, %v29
  %v31 = vmul.f32 %v28, %v29
  %v32 = vsub.f32 %v18, %v30
  %v33 = vsub.f32 %v19, %v31
  %v34 = vmul.f32 %v32, %v32
  %v35 = vmul.f32 %v33, %v33
  %v36 = vsel %vm22, %v34, 0.0
  %37 = vadd.xlane.f32.xlu0 %v36
  %v38 = vpop.xlane.xlu0 %37
  %v39 = vsel %vm22, %v35, 0.0
  %40 = vadd.xlane.f32.xlu0 %v39
  %v41 = vpop.xlane.xlu0 %40
  %v42 = vmul.f32 %v38, %v29
  %v43 = vmul.f32 %v41, %v29
  %v44 = vadd.f32 %v42, 1e-05
  %v45 = vadd.f32 %v43, 1e-05
  %v46 = vrsqrt.pop %v44
  %v47 = vrsqrt.pop %v45
  %v48 = vmul.f32 %v32, %v46
  %v49 = vmul.f32 %v33, %v47
  %v51 = vlaneseq
  %v52 = vshrl.u32 %v51, 7
  %v53 = vsub.s32 0, %v52
  %v54 = vrot.slane %v20, %v53
  %v56 = vmul.f32 %v48, %v54
  %v57 = vmul.f32 %v49, %v54
  %v59 = vlaneseq
  %v60 = vshrl.u32 %v59, 7
  %v61 = vsub.s32 0, %v60
  %v62 = vrot.slane %v21, %v61
  %v64 = vadd.f32 %v56, %v62
  %v65 = vadd.f32 %v57, %v62
  %v66 = vld [vmem:[%s3] sm:$0xff]
  %v67 = vld [vmem:[%s3 + $0x8] sm:$0xff]
  %v68 = vld [vmem:[%s3 + $0x10] sm:$0xff]
  %v69 = vld [vmem:[%s3 + $0x18] sm:$0xff]
  %v70 = vld [vmem:[%s3 + $0x20] sm:$0xff]
  %v71 = vld [vmem:[%s3 + $0x28] sm:$0xff]
  %v72 = vld [vmem:[%s3 + $0x30] sm:$0xff]
  %v73 = vld [vmem:[%s3 + $0x38] sm:$0xff]
  %v74 = vld [vmem:[%s3 + $0x40] sm:$0xff]
  %v75 = vld [vmem:[%s3 + $0x48] sm:$0xff]
  %v76 = vld [vmem:[%s3 + $0x50] sm:$0xff]
  %v77 = vld [vmem:[%s3 + $0x58] sm:$0xff]
  %v78 = vld [vmem:[%s3 + $0x60] sm:$0xff]
  %v79 = vld [vmem:[%s3 + $0x68] sm:$0xff]
  %v80 = vld [vmem:[%s3 + $0x70] sm:$0xff]
  %v81 = vld [vmem:[%s3 + $0x78] sm:$0xff]
  %v82 = vpack.c.bf16 %v65, %v64
  %v83 = vpack.c.bf16 %v68, %v66
  %v84 = vpack.c.bf16 %v69, %v67
  %v85 = vpack.c.bf16 %v72, %v70
  %v86 = vpack.c.bf16 %v73, %v71
  %v87 = vpack.c.bf16 %v76, %v74
  %v88 = vpack.c.bf16 %v77, %v75
  %v89 = vpack.c.bf16 %v80, %v78
  %v90 = vpack.c.bf16 %v81, %v79
  %v92 = vsel %vm22, %v82, 0
  %94 = vmatprep.subr.bf16.mxu0 0
  %95 = vmatpush1.bf16.msra.mxu0 0
  %96 = vmatprep.subr.bf16.mxu0 0
  %97 = vmatpush1.bf16.msra.mxu0 0
  %98 = vmatprep.subr.bf16.mxu0 0
  %99 = vmatpush1.bf16.msra.mxu0 0
  %100 = vmatprep.subr.bf16.mxu0 0
  %101 = vmatpush1.bf16.msra.mxu0 0
  %102 = vmatprep.subr.bf16.mxu0 %v90
  %103 = vmatpush1.bf16.msra.mxu0 %v89
  %104 = vmatprep.subr.bf16.mxu0 %v88
  %105 = vmatpush1.bf16.msra.mxu0 %v87
  %106 = vmatprep.subr.bf16.mxu0 %v86
  %107 = vmatpush1.bf16.msra.mxu0 %v85
  %108 = vmatprep.subr.bf16.mxu0 %v84
  %109 = vmatpush1.bf16.msra.mxu0 %v83
  %110 = vmatprep.subr.bf16.mxu0 0
  %111 = vmatpush2.bf16.msra.mxu0 0
  %112 = vmatprep.subr.bf16.mxu0 0
  %113 = vmatpush2.bf16.msra.mxu0 0
  %114 = vmatprep.subr.bf16.mxu0 0
  %115 = vmatpush2.bf16.msra.mxu0 0
  %116 = vmatprep.subr.bf16.mxu0 0
  %117 = vmatpush2.bf16.msra.mxu0 0
  %118 = vmatprep.subr.bf16.mxu0 0
  %119 = vmatpush2.bf16.msra.mxu0 0
  %120 = vmatprep.subr.bf16.mxu0 0
  %121 = vmatpush2.bf16.msra.mxu0 0
  %122 = vmatprep.subr.bf16.mxu0 0
  %123 = vmatpush2.bf16.msra.mxu0 0
  %124 = vmatprep.subr.bf16.mxu0 0
  %125 = vmatpush2.bf16.msra.mxu0 0
  %126 = vmatprep.mubr.bf16.mxu0 0
  %127 = vmatmul.mubr.bf16.gmra.mxu0 %v92
  %v128 = vpop.f32.mrf.mxu0
  %v129 = vadd.f32 0.0, %v128
  %v130 = vpop.f32.mrf.mxu0
  %v131 = vadd.f32 0.0, %v130
  %v132 = vpop.f32.mrf.mxu0
  %v133 = vadd.f32 0.0, %v132
  %v134 = vpop.f32.mrf.mxu0
  %v135 = vadd.f32 0.0, %v134
  %136 = vdwg.mxu0
  %137 = vst [vmem:[%s4] sm:$0xff] %v129
  %138 = vst [vmem:[%s4 + $0x8] sm:$0xff] %v131
  %139 = vst [vmem:[%s4 + $0x10] sm:$0xff] %v133
  %140 = vst [vmem:[%s4 + $0x18] sm:$0xff] %v135
  // Predicated region
  $region18: #{_lambda_.9} parent=0 // pred_check
    _
  $region19: #{_lambda_.9} parent=0 // pred_check_branch
    %142 = sbr.rel (0) target = $region21
  $region20: #{_lambda_.9} parent=0 // pred_region
    _
  $region21: #{_lambda_.9} parent=0 // pred_fallthru
    _
  // Predicated region
  $region22: #{_lambda_.9} parent=0 // pred_check
    _
  $region23: #{_lambda_.9} parent=0 // pred_check_branch
    %144 = sbr.rel (0) target = $region25
  $region24: #{_lambda_.9} parent=0 // pred_region
    _
  $region25: #{_lambda_.9} parent=0 // pred_fallthru
    _

// kernel: _lambda_.8
$region0: #{_lambda_.8}
  #allocation0 [shape = 'u32[]', space=smem, size = 0x4, offset = 0x4, fixed_abs, tag = 'smem constant byte address 0x4 - core index']
  #allocation1 [shape = 'u32[144,128]{1,0:T(1,128)}', space=vmem, size = 0x12000, scoped, tag = 'internal scratch']
  %s0 = inlined_call_operand.vmem [shape: f32[16,32], index: 0, kind: input, shape index: {}]
  %s1 = inlined_call_operand.vmem [shape: f32[16,64], index: 1, kind: input, shape index: {}]
  %s2 = inlined_call_operand.vmem [shape: f32[32,64], index: 2, kind: input, shape index: {}]
  %s3 = inlined_call_operand.vmem [shape: f32[1,64], index: 3, kind: input, shape index: {}]
  %s4 = inlined_call_operand.vmem [shape: f32[64,64], index: 4, kind: input, shape index: {}]
  %s5 = inlined_call_operand.vmem [shape: f32[1,64], index: 5, kind: input, shape index: {}]
  %s6 = inlined_call_operand.vmem [shape: f32[16,64], index: 6, kind: output, shape index: {}]
  %s7 = sld [smem:[#allocation0]]
  $region34: #{_lambda_.8} parent=0
    _
  %s9 = ssub.s32 1, %s7
  %s10 = scalar_select 0, %s9, %s7
  // Predicated region
  $region2: #{_lambda_.8} parent=0 // pred_check
    _
  $region3: #{_lambda_.8} parent=0 // pred_check_branch
    %12 = sbr.rel (0) target = $region5
  $region4: #{_lambda_.8} parent=0 // pred_region
    _
  $region5: #{_lambda_.8} parent=0 // pred_fallthru
    _
  // Predicated region
  $region6: #{_lambda_.8} parent=0 // pred_check
    _
  $region7: #{_lambda_.8} parent=0 // pred_check_branch
    %14 = sbr.rel (0) target = $region9
  $region8: #{_lambda_.8} parent=0 // pred_region
    _
  $region9: #{_lambda_.8} parent=0 // pred_fallthru
    _
  // Predicated region
  $region10: #{_lambda_.8} parent=0 // pred_check
    _
  $region11: #{_lambda_.8} parent=0 // pred_check_branch
    %16 = sbr.rel (0) target = $region13
  $region12: #{_lambda_.8} parent=0 // pred_region
    _
  $region13: #{_lambda_.8} parent=0 // pred_fallthru
    _
  // Predicated region
  $region14: #{_lambda_.8} parent=0 // pred_check
    _
  $region15: #{_lambda_.8} parent=0 // pred_check_branch
    %18 = sbr.rel (0) target = $region17
  $region16: #{_lambda_.8} parent=0 // pred_region
    _
  $region17: #{_lambda_.8} parent=0 // pred_fallthru
    _
  // Predicated region
  $region18: #{_lambda_.8} parent=0 // pred_check
    _
  $region19: #{_lambda_.8} parent=0 // pred_check_branch
    %20 = sbr.rel (0) target = $region21
  $region20: #{_lambda_.8} parent=0 // pred_region
    _
  $region21: #{_lambda_.8} parent=0 // pred_fallthru
    _
  // Predicated region
  $region22: #{_lambda_.8} parent=0 // pred_check
    _
  $region23: #{_lambda_.8} parent=0 // pred_check_branch
    %22 = sbr.rel (0) target = $region25
  $region24: #{_lambda_.8} parent=0 // pred_region
    _
  $region25: #{_lambda_.8} parent=0 // pred_fallthru
    _
  %v24 = vld [vmem:[%s0] sm:$0xff]
  %v25 = vld [vmem:[%s0 + $0x8] sm:$0xff]
  %v26 = vld [vmem:[%s2] sm:$0xff]
  %v27 = vld [vmem:[%s2 + $0x8] sm:$0xff]
  %v28 = vld [vmem:[%s2 + $0x10] sm:$0xff]
  %v29 = vld [vmem:[%s2 + $0x18] sm:$0xff]
  %v30 = vpack.c.bf16 %v25, %v24
  %v31 = vpack.c.bf16 %v27, %v26
  %v32 = vpack.c.bf16 %v29, %v28
  %v33 = vld [vmem:[%s3] sm:$0x1]
  %v35 = vlaneseq
  %v36 = vshrl.u32 %v35, 7
  %v37 = vsub.s32 0, %v36
  %v38 = vrot.slane %v33, %v37
  %vm40 = vcmask 261120
  %v42 = vsel %vm40, %v30, 0
  %44 = vmatprep.subr.bf16.mxu0 0
  %45 = vmatpush1.bf16.msra.mxu0 0
  %46 = vmatprep.subr.bf16.mxu0 0
  %47 = vmatpush1.bf16.msra.mxu0 0
  %48 = vmatprep.subr.bf16.mxu0 0
  %49 = vmatpush1.bf16.msra.mxu0 0
  %50 = vmatprep.subr.bf16.mxu0 0
  %51 = vmatpush1.bf16.msra.mxu0 0
  %52 = vmatprep.subr.bf16.mxu0 0
  %53 = vmatpush1.bf16.msra.mxu0 0
  %54 = vmatprep.subr.bf16.mxu0 0
  %55 = vmatpush1.bf16.msra.mxu0 0
  %56 = vmatprep.subr.bf16.mxu0 0
  %57 = vmatpush1.bf16.msra.mxu0 %v32
  %58 = vmatprep.subr.bf16.mxu0 0
  %59 = vmatpush1.bf16.msra.mxu0 %v31
  %60 = vmatprep.subr.bf16.mxu0 0
  %61 = vmatpush2.bf16.msra.mxu0 0
  %62 = vmatprep.subr.bf16.mxu0 0
  %63 = vmatpush2.bf16.msra.mxu0 0
  %64 = vmatprep.subr.bf16.mxu0 0
  %65 = vmatpush2.bf16.msra.mxu0 0
  %66 = vmatprep.subr.bf16.mxu0 0
  %67 = vmatpush2.bf16.msra.mxu0 0
  %68 = vmatprep.subr.bf16.mxu0 0
  %69 = vmatpush2.bf16.msra.mxu0 0
  %70 = vmatprep.subr.bf16.mxu0 0
  %71 = vmatpush2.bf16.msra.mxu0 0
  %72 = vmatprep.subr.bf16.mxu0 0
  %73 = vmatpush2.bf16.msra.mxu0 0
  %74 = vmatprep.subr.bf16.mxu0 0
  %75 = vmatpush2.bf16.msra.mxu0 0
  %76 = vmatprep.mubr.bf16.mxu0 0
  %77 = vmatmul.mubr.bf16.gmra.mxu0 %v42
  %v78 = vpop.f32.mrf.mxu0
  %v79 = vadd.f32 %v38, %v78
  %v80 = vpop.f32.mrf.mxu0
  %v81 = vpop.f32.mrf.mxu0
  %v82 = vadd.f32 %v38, %v81
  %v83 = vpop.f32.mrf.mxu0
  %84 = vdwg.mxu0
  %v85 = vld [vmem:[%s4] sm:$0xff]
  %v86 = vld [vmem:[%s4 + $0x8] sm:$0xff]
  %v87 = vld [vmem:[%s4 + $0x10] sm:$0xff]
  %v88 = vld [vmem:[%s4 + $0x18] sm:$0xff]
  %v89 = vld [vmem:[%s4 + $0x20] sm:$0xff]
  %v90 = vld [vmem:[%s4 + $0x28] sm:$0xff]
  %v91 = vld [vmem:[%s4 + $0x30] sm:$0xff]
  %v92 = vld [vmem:[%s4 + $0x38] sm:$0xff]
  %v93 = vpack.c.bf16 %v82, %v79
  %v94 = vpack.c.bf16 %v86, %v85
  %v95 = vpack.c.bf16 %v88, %v87
  %v96 = vpack.c.bf16 %v90, %v89
  %v97 = vpack.c.bf16 %v92, %v91
  %v98 = vld [vmem:[%s5] sm:$0x1]
  %v100 = vlaneseq
  %v101 = vshrl.u32 %v100, 7
  %v102 = vsub.s32 0, %v101
  %v103 = vrot.slane %v98, %v102
  %vm105 = vcmask 523264
  %v107 = vsel %vm105, %v93, 0
  %109 = vmatprep.subr.bf16.mxu0 0
  %110 = vmatpush1.bf16.msra.mxu0 0
  %111 = vmatprep.subr.bf16.mxu0 0
  %112 = vmatpush1.bf16.msra.mxu0 0
  %113 = vmatprep.subr.bf16.mxu0 0
  %114 = vmatpush1.bf16.msra.mxu0 0
  %115 = vmatprep.subr.bf16.mxu0 0
  %116 = vmatpush1.bf16.msra.mxu0 0
  %117 = vmatprep.subr.bf16.mxu0 0
  %118 = vmatpush1.bf16.msra.mxu0 %v97
  %119 = vmatprep.subr.bf16.mxu0 0
  %120 = vmatpush1.bf16.msra.mxu0 %v96
  %121 = vmatprep.subr.bf16.mxu0 0
  %122 = vmatpush1.bf16.msra.mxu0 %v95
  %123 = vmatprep.subr.bf16.mxu0 0
  %124 = vmatpush1.bf16.msra.mxu0 %v94
  %125 = vmatprep.subr.bf16.mxu0 0
  %126 = vmatpush2.bf16.msra.mxu0 0
  %127 = vmatprep.subr.bf16.mxu0 0
  %128 = vmatpush2.bf16.msra.mxu0 0
  %129 = vmatprep.subr.bf16.mxu0 0
  %130 = vmatpush2.bf16.msra.mxu0 0
  %131 = vmatprep.subr.bf16.mxu0 0
  %132 = vmatpush2.bf16.msra.mxu0 0
  %133 = vmatprep.subr.bf16.mxu0 0
  %134 = vmatpush2.bf16.msra.mxu0 0
  %135 = vmatprep.subr.bf16.mxu0 0
  %136 = vmatpush2.bf16.msra.mxu0 0
  %137 = vmatprep.subr.bf16.mxu0 0
  %138 = vmatpush2.bf16.msra.mxu0 0
  %139 = vmatprep.subr.bf16.mxu0 0
  %140 = vmatpush2.bf16.msra.mxu0 0
  %141 = vmatprep.mubr.bf16.mxu0 0
  %142 = vmatmul.mubr.bf16.gmra.mxu0 %v107
  %v143 = vpop.f32.mrf.mxu0
  %v144 = vadd.f32 %v103, %v143
  %v145 = vpop.f32.mrf.mxu0
  %v146 = vpop.f32.mrf.mxu0
  %v147 = vadd.f32 %v103, %v146
  %v148 = vpop.f32.mrf.mxu0
  %149 = vdwg.mxu0
  %v150 = vld [vmem:[%s1] sm:$0xff]
  %v151 = vld [vmem:[%s1 + $0x8] sm:$0xff]
  %v152 = vadd.f32 %v144, %v150
  %v153 = vadd.f32 %v147, %v151
  %154 = vst.msk [vmem:[%s6] sm:$0xff] %vm105, %v152
  %155 = vst.msk [vmem:[%s6 + $0x8] sm:$0xff] %vm105, %v153
  // Predicated region
  $region26: #{_lambda_.8} parent=0 // pred_check
    _
  $region27: #{_lambda_.8} parent=0 // pred_check_branch
    %157 = sbr.rel (0) target = $region29
  $region28: #{_lambda_.8} parent=0 // pred_region
    _
  $region29: #{_lambda_.8} parent=0 // pred_fallthru
    _
  // Predicated region
  $region30: #{_lambda_.8} parent=0 // pred_check
    _
  $region31: #{_lambda_.8} parent=0 // pred_check_branch
    %159 = sbr.rel (0) target = $region33
  $region32: #{_lambda_.8} parent=0 // pred_region
    _
  $region33: #{_lambda_.8} parent=0 // pred_fallthru
    _

// kernel: _lambda_.10
$region0: #{_lambda_.10}
  #allocation0 [shape = 'u32[]', space=smem, size = 0x4, offset = 0x4, fixed_abs, tag = 'smem constant byte address 0x4 - core index']
  #allocation1 [shape = 'u32[144,128]{1,0:T(1,128)}', space=vmem, size = 0x12000, scoped, tag = 'internal scratch']
  #allocation2 [shape = 'f32[16,128]{1,0:T(8,128)}', space=vmem, size = 0x2000, scoped, tag = 'scratch operand']
  %s0 = inlined_call_operand.vmem [shape: f32[8,16,128], index: 0, kind: input, shape index: {}]
  %s1 = inlined_call_operand.vmem [shape: f32[8,16,128], index: 1, kind: input, shape index: {}]
  %s2 = inlined_call_operand.vmem [shape: f32[8,1,128], index: 2, kind: input, shape index: {}]
  %s3 = inlined_call_operand.vmem [shape: f32[8,1,128], index: 3, kind: input, shape index: {}]
  %s4 = inlined_call_operand.vmem [shape: f32[8,1,128], index: 4, kind: output, shape index: {}]
  %s5 = sld [smem:[#allocation0]]
  $region30: #{_lambda_.10} parent=0
    _
  %s7 = ssub.s32 1, %s5
  %s8 = scalar_select 0, %s7, %s5
  // Predicated region
  $region2: #{_lambda_.10} parent=0 // pred_check
    _
  $region3: #{_lambda_.10} parent=0 // pred_check_branch
    %10 = sbr.rel (0) target = $region5
  $region4: #{_lambda_.10} parent=0 // pred_region
    _
  $region5: #{_lambda_.10} parent=0 // pred_fallthru
    _
  // Predicated region
  $region6: #{_lambda_.10} parent=0 // pred_check
    _
  $region7: #{_lambda_.10} parent=0 // pred_check_branch
    %12 = sbr.rel (0) target = $region9
  $region8: #{_lambda_.10} parent=0 // pred_region
    _
  $region9: #{_lambda_.10} parent=0 // pred_fallthru
    _
  // Predicated region
  $region10: #{_lambda_.10} parent=0 // pred_check
    _
  $region11: #{_lambda_.10} parent=0 // pred_check_branch
    %14 = sbr.rel (0) target = $region13
  $region12: #{_lambda_.10} parent=0 // pred_region
    _
  $region13: #{_lambda_.10} parent=0 // pred_fallthru
    _
  // Predicated region
  $region14: #{_lambda_.10} parent=0 // pred_check
    _
  $region15: #{_lambda_.10} parent=0 // pred_check_branch
    %16 = sbr.rel (0) target = $region17
  $region16: #{_lambda_.10} parent=0 // pred_region
    _
  $region17: #{_lambda_.10} parent=0 // pred_fallthru
    _
  %p17 = scmp.eq.s32.totalorder 0, 0
  // Predicated region
  $region18: #{_lambda_.10} parent=0 // pred_check
    %p18 = pneg %p17
  $region19: #{_lambda_.10} parent=0 // pred_check_branch
    %20 = sbr.rel (%p18) target = $region21
  $region20: #{_lambda_.10} parent=0 // pred_region
    %21 = vst [vmem:[#allocation2] sm:$0xff] 0.0
    %22 = vst [vmem:[#allocation2 + $0x8] sm:$0xff] 0.0
  $region21: #{_lambda_.10} parent=0 // pred_fallthru
    _
  %v23 = vld [vmem:[%s0] sm:$0xff]
  %v24 = vld [vmem:[%s0 + $0x8] sm:$0xff]
  %v25 = vld [vmem:[%s0 + $0x10] sm:$0xff]
  %v26 = vld [vmem:[%s0 + $0x18] sm:$0xff]
  %v27 = vld [vmem:[%s0 + $0x20] sm:$0xff]
  %v28 = vld [vmem:[%s0 + $0x28] sm:$0xff]
  %v29 = vld [vmem:[%s0 + $0x30] sm:$0xff]
  %v30 = vld [vmem:[%s0 + $0x38] sm:$0xff]
  %v31 = vld [vmem:[%s0 + $0x40] sm:$0xff]
  %v32 = vld [vmem:[%s0 + $0x48] sm:$0xff]
  %v33 = vld [vmem:[%s0 + $0x50] sm:$0xff]
  %v34 = vld [vmem:[%s0 + $0x58] sm:$0xff]
  %v35 = vld [vmem:[%s0 + $0x60] sm:$0xff]
  %v36 = vld [vmem:[%s0 + $0x68] sm:$0xff]
  %v37 = vld [vmem:[%s0 + $0x70] sm:$0xff]
  %v38 = vld [vmem:[%s0 + $0x78] sm:$0xff]
  %v39 = vmax.f32 %v23, %v24
  %v40 = vrot.slane %v39, 4
  %v41 = vmax.f32 %v39, %v40
  %v42 = vrot.slane %v41, 2
  %v43 = vmax.f32 %v41, %v42
  %v44 = vrot.slane %v43, 1
  %v45 = vmax.f32 %v43, %v44
  %v46 = vmax.f32 %v25, %v26
  %v47 = vrot.slane %v46, 4
  %v48 = vmax.f32 %v46, %v47
  %v49 = vrot.slane %v48, 2
  %v50 = vmax.f32 %v48, %v49
  %v51 = vrot.slane %v50, 1
  %v52 = vmax.f32 %v50, %v51
  %v53 = vmax.f32 %v27, %v28
  %v54 = vrot.slane %v53, 4
  %v55 = vmax.f32 %v53, %v54
  %v56 = vrot.slane %v55, 2
  %v57 = vmax.f32 %v55, %v56
  %v58 = vrot.slane %v57, 1
  %v59 = vmax.f32 %v57, %v58
  %v60 = vmax.f32 %v29, %v30
  %v61 = vrot.slane %v60, 4
  %v62 = vmax.f32 %v60, %v61
  %v63 = vrot.slane %v62, 2
  %v64 = vmax.f32 %v62, %v63
  %v65 = vrot.slane %v64, 1
  %v66 = vmax.f32 %v64, %v65
  %v67 = vmax.f32 %v31, %v32
  %v68 = vrot.slane %v67, 4
  %v69 = vmax.f32 %v67, %v68
  %v70 = vrot.slane %v69, 2
  %v71 = vmax.f32 %v69, %v70
  %v72 = vrot.slane %v71, 1
  %v73 = vmax.f32 %v71, %v72
  %v74 = vmax.f32 %v33, %v34
  %v75 = vrot.slane %v74, 4
  %v76 = vmax.f32 %v74, %v75
  %v77 = vrot.slane %v76, 2
  %v78 = vmax.f32 %v76, %v77
  %v79 = vrot.slane %v78, 1
  %v80 = vmax.f32 %v78, %v79
  %v81 = vmax.f32 %v35, %v36
  %v82 = vrot.slane %v81, 4
  %v83 = vmax.f32 %v81, %v82
  %v84 = vrot.slane %v83, 2
  %v85 = vmax.f32 %v83, %v84
  %v86 = vrot.slane %v85, 1
  %v87 = vmax.f32 %v85, %v86
  %v88 = vmax.f32 %v37, %v38
  %v89 = vrot.slane %v88, 4
  %v90 = vmax.f32 %v88, %v89
  %v91 = vrot.slane %v90, 2
  %v92 = vmax.f32 %v90, %v91
  %v93 = vrot.slane %v92, 1
  %v94 = vmax.f32 %v92, %v93
  %v95 = vsub.f32 %v23, %v45
  %v96 = vsub.f32 %v24, %v45
  %v97 = vsub.f32 %v25, %v52
  %v98 = vsub.f32 %v26, %v52
  %v99 = vsub.f32 %v27, %v59
  %v100 = vsub.f32 %v28, %v59
  %v101 = vsub.f32 %v29, %v66
  %v102 = vsub.f32 %v30, %v66
  %v103 = vsub.f32 %v31, %v73
  %v104 = vsub.f32 %v32, %v73
  %v105 = vsub.f32 %v33, %v80
  %v106 = vsub.f32 %v34, %v80
  %v107 = vsub.f32 %v35, %v87
  %v108 = vsub.f32 %v36, %v87
  %v109 = vsub.f32 %v37, %v94
  %v110 = vsub.f32 %v38, %v94
  %v111 = vmul.f32 %v95, 1.442695
  %v112 = vpow.pop %v111
  %v113 = vmul.f32 %v96, 1.442695
  %v114 = vpow.pop %v113
  %v115 = vmul.f32 %v97, 1.442695
  %v116 = vpow.pop %v115
  %v117 = vmul.f32 %v98, 1.442695
  %v118 = vpow.pop %v117
  %v119 = vmul.f32 %v99, 1.442695
  %v120 = vpow.pop %v119
  %v121 = vmul.f32 %v100, 1.442695
  %v122 = vpow.pop %v121
  %v123 = vmul.f32 %v101, 1.442695
  %v124 = vpow.pop %v123
  %v125 = vmul.f32 %v102, 1.442695
  %v126 = vpow.pop %v125
  %v127 = vmul.f32 %v103, 1.442695
  %v128 = vpow.pop %v127
  %v129 = vmul.f32 %v104, 1.442695
  %v130 = vpow.pop %v129
  %v131 = vmul.f32 %v105, 1.442695
  %v132 = vpow.pop %v131
  %v133 = vmul.f32 %v106, 1.442695
  %v134 = vpow.pop %v133
  %v135 = vmul.f32 %v107, 1.442695
  %v136 = vpow.pop %v135
  %v137 = vmul.f32 %v108, 1.442695
  %v138 = vpow.pop %v137
  %v139 = vmul.f32 %v109, 1.442695
  %v140 = vpow.pop %v139
  %v141 = vmul.f32 %v110, 1.442695
  %v142 = vpow.pop %v141
  %v143 = vadd.f32 %v112, %v114
  %v144 = vrot.slane %v143, 4
  %v145 = vadd.f32 %v143, %v144
  %v146 = vrot.slane %v145, 2
  %v147 = vadd.f32 %v145, %v146
  %v148 = vrot.slane %v147, 1
  %v149 = vadd.f32 %v147, %v148
  %v150 = vadd.f32 %v116, %v118
  %v151 = vrot.slane %v150, 4
  %v152 = vadd.f32 %v150, %v151
  %v153 = vrot.slane %v152, 2
  %v154 = vadd.f32 %v152, %v153
  %v155 = vrot.slane %v154, 1
  %v156 = vadd.f32 %v154, %v155
  %v157 = vadd.f32 %v120, %v122
  %v158 = vrot.slane %v157, 4
  %v159 = vadd.f32 %v157, %v158
  %v160 = vrot.slane %v159, 2
  %v161 = vadd.f32 %v159, %v160
  %v162 = vrot.slane %v161, 1
  %v163 = vadd.f32 %v161, %v162
  %v164 = vadd.f32 %v124, %v126
  %v165 = vrot.slane %v164, 4
  %v166 = vadd.f32 %v164, %v165
  %v167 = vrot.slane %v166, 2
  %v168 = vadd.f32 %v166, %v167
  %v169 = vrot.slane %v168, 1
  %v170 = vadd.f32 %v168, %v169
  %v171 = vadd.f32 %v128, %v130
  %v172 = vrot.slane %v171, 4
  %v173 = vadd.f32 %v171, %v172
  %v174 = vrot.slane %v173, 2
  %v175 = vadd.f32 %v173, %v174
  %v176 = vrot.slane %v175, 1
  %v177 = vadd.f32 %v175, %v176
  %v178 = vadd.f32 %v132, %v134
  %v179 = vrot.slane %v178, 4
  %v180 = vadd.f32 %v178, %v179
  %v181 = vrot.slane %v180, 2
  %v182 = vadd.f32 %v180, %v181
  %v183 = vrot.slane %v182, 1
  %v184 = vadd.f32 %v182, %v183
  %v185 = vadd.f32 %v136, %v138
  %v186 = vrot.slane %v185, 4
  %v187 = vadd.f32 %v185, %v186
  %v188 = vrot.slane %v187, 2
  %v189 = vadd.f32 %v187, %v188
  %v190 = vrot.slane %v189, 1
  %v191 = vadd.f32 %v189, %v190
  %v192 = vadd.f32 %v140, %v142
  %v193 = vrot.slane %v192, 4
  %v194 = vadd.f32 %v192, %v193
  %v195 = vrot.slane %v194, 2
  %v196 = vadd.f32 %v194, %v195
  %v197 = vrot.slane %v196, 1
  %v198 = vadd.f32 %v196, %v197
  %v199 = vrcp.pop %v149
  %v200 = vrcp.pop %v156
  %v201 = vrcp.pop %v163
  %v202 = vrcp.pop %v170
  %v203 = vrcp.pop %v177
  %v204 = vrcp.pop %v184
  %v205 = vrcp.pop %v191
  %v206 = vrcp.pop %v198
  %v207 = vmul.f32 %v112, %v199
  %v208 = vmul.f32 %v114, %v199
  %v209 = vmul.f32 %v116, %v200
  %v210 = vmul.f32 %v118, %v200
  %v211 = vmul.f32 %v120, %v201
  %v212 = vmul.f32 %v122, %v201
  %v213 = vmul.f32 %v124, %v202
  %v214 = vmul.f32 %v126, %v202
  %v215 = vmul.f32 %v128, %v203
  %v216 = vmul.f32 %v130, %v203
  %v217 = vmul.f32 %v132, %v204
  %v218 = vmul.f32 %v134, %v204
  %v219 = vmul.f32 %v136, %v205
  %v220 = vmul.f32 %v138, %v205
  %v221 = vmul.f32 %v140, %v206
  %v222 = vmul.f32 %v142, %v206
  %v223 = vld [vmem:[%s1] sm:$0xff]
  %v224 = vld [vmem:[%s1 + $0x8] sm:$0xff]
  %v225 = vld [vmem:[%s1 + $0x10] sm:$0xff]
  %v226 = vld [vmem:[%s1 + $0x18] sm:$0xff]
  %v227 = vld [vmem:[%s1 + $0x20] sm:$0xff]
  %v228 = vld [vmem:[%s1 + $0x28] sm:$0xff]
  %v229 = vld [vmem:[%s1 + $0x30] sm:$0xff]
  %v230 = vld [vmem:[%s1 + $0x38] sm:$0xff]
  %v231 = vld [vmem:[%s1 + $0x40] sm:$0xff]
  %v232 = vld [vmem:[%s1 + $0x48] sm:$0xff]
  %v233 = vld [vmem:[%s1 + $0x50] sm:$0xff]
  %v234 = vld [vmem:[%s1 + $0x58] sm:$0xff]
  %v235 = vld [vmem:[%s1 + $0x60] sm:$0xff]
  %v236 = vld [vmem:[%s1 + $0x68] sm:$0xff]
  %v237 = vld [vmem:[%s1 + $0x70] sm:$0xff]
  %v238 = vld [vmem:[%s1 + $0x78] sm:$0xff]
  %v239 = vmax.f32 %v223, %v224
  %v240 = vrot.slane %v239, 4
  %v241 = vmax.f32 %v239, %v240
  %v242 = vrot.slane %v241, 2
  %v243 = vmax.f32 %v241, %v242
  %v244 = vrot.slane %v243, 1
  %v245 = vmax.f32 %v243, %v244
  %v246 = vmax.f32 %v225, %v226
  %v247 = vrot.slane %v246, 4
  %v248 = vmax.f32 %v246, %v247
  %v249 = vrot.slane %v248, 2
  %v250 = vmax.f32 %v248, %v249
  %v251 = vrot.slane %v250, 1
  %v252 = vmax.f32 %v250, %v251
  %v253 = vmax.f32 %v227, %v228
  %v254 = vrot.slane %v253, 4
  %v255 = vmax.f32 %v253, %v254
  %v256 = vrot.slane %v255, 2
  %v257 = vmax.f32 %v255, %v256
  %v258 = vrot.slane %v257, 1
  %v259 = vmax.f32 %v257, %v258
  %v260 = vmax.f32 %v229, %v230
  %v261 = vrot.slane %v260, 4
  %v262 = vmax.f32 %v260, %v261
  %v263 = vrot.slane %v262, 2
  %v264 = vmax.f32 %v262, %v263
  %v265 = vrot.slane %v264, 1
  %v266 = vmax.f32 %v264, %v265
  %v267 = vmax.f32 %v231, %v232
  %v268 = vrot.slane %v267, 4
  %v269 = vmax.f32 %v267, %v268
  %v270 = vrot.slane %v269, 2
  %v271 = vmax.f32 %v269, %v270
  %v272 = vrot.slane %v271, 1
  %v273 = vmax.f32 %v271, %v272
  %v274 = vmax.f32 %v233, %v234
  %v275 = vrot.slane %v274, 4
  %v276 = vmax.f32 %v274, %v275
  %v277 = vrot.slane %v276, 2
  %v278 = vmax.f32 %v276, %v277
  %v279 = vrot.slane %v278, 1
  %v280 = vmax.f32 %v278, %v279
  %v281 = vmax.f32 %v235, %v236
  %v282 = vrot.slane %v281, 4
  %v283 = vmax.f32 %v281, %v282
  %v284 = vrot.slane %v283, 2
  %v285 = vmax.f32 %v283, %v284
  %v286 = vrot.slane %v285, 1
  %v287 = vmax.f32 %v285, %v286
  %v288 = vmax.f32 %v237, %v238
  %v289 = vrot.slane %v288, 4
  %v290 = vmax.f32 %v288, %v289
  %v291 = vrot.slane %v290, 2
  %v292 = vmax.f32 %v290, %v291
  %v293 = vrot.slane %v292, 1
  %v294 = vmax.f32 %v292, %v293
  %v295 = vsub.f32 %v223, %v245
  %v296 = vsub.f32 %v224, %v245
  %v297 = vsub.f32 %v225, %v252
  %v298 = vsub.f32 %v226, %v252
  %v299 = vsub.f32 %v227, %v259
  %v300 = vsub.f32 %v228, %v259
  %v301 = vsub.f32 %v229, %v266
  %v302 = vsub.f32 %v230, %v266
  %v303 = vsub.f32 %v231, %v273
  %v304 = vsub.f32 %v232, %v273
  %v305 = vsub.f32 %v233, %v280
  %v306 = vsub.f32 %v234, %v280
  %v307 = vsub.f32 %v235, %v287
  %v308 = vsub.f32 %v236, %v287
  %v309 = vsub.f32 %v237, %v294
  %v310 = vsub.f32 %v238, %v294
  %v311 = vmul.f32 %v295, 1.442695
  %v312 = vpow.pop %v311
  %v313 = vmul.f32 %v296, 1.442695
  %v314 = vpow.pop %v313
  %v315 = vmul.f32 %v297, 1.442695
  %v316 = vpow.pop %v315
  %v317 = vmul.f32 %v298, 1.442695
  %v318 = vpow.pop %v317
  %v319 = vmul.f32 %v299, 1.442695
  %v320 = vpow.pop %v319
  %v321 = vmul.f32 %v300, 1.442695
  %v322 = vpow.pop %v321
  %v323 = vmul.f32 %v301, 1.442695
  %v324 = vpow.pop %v323
  %v325 = vmul.f32 %v302, 1.442695
  %v326 = vpow.pop %v325
  %v327 = vmul.f32 %v303, 1.442695
  %v328 = vpow.pop %v327
  %v329 = vmul.f32 %v304, 1.442695
  %v330 = vpow.pop %v329
  %v331 = vmul.f32 %v305, 1.442695
  %v332 = vpow.pop %v331
  %v333 = vmul.f32 %v306, 1.442695
  %v334 = vpow.pop %v333
  %v335 = vmul.f32 %v307, 1.442695
  %v336 = vpow.pop %v335
  %v337 = vmul.f32 %v308, 1.442695
  %v338 = vpow.pop %v337
  %v339 = vmul.f32 %v309, 1.442695
  %v340 = vpow.pop %v339
  %v341 = vmul.f32 %v310, 1.442695
  %v342 = vpow.pop %v341
  %v343 = vadd.f32 %v312, %v314
  %v344 = vrot.slane %v343, 4
  %v345 = vadd.f32 %v343, %v344
  %v346 = vrot.slane %v345, 2
  %v347 = vadd.f32 %v345, %v346
  %v348 = vrot.slane %v347, 1
  %v349 = vadd.f32 %v347, %v348
  %v350 = vadd.f32 %v316, %v318
  %v351 = vrot.slane %v350, 4
  %v352 = vadd.f32 %v350, %v351
  %v353 = vrot.slane %v352, 2
  %v354 = vadd.f32 %v352, %v353
  %v355 = vrot.slane %v354, 1
  %v356 = vadd.f32 %v354, %v355
  %v357 = vadd.f32 %v320, %v322
  %v358 = vrot.slane %v357, 4
  %v359 = vadd.f32 %v357, %v358
  %v360 = vrot.slane %v359, 2
  %v361 = vadd.f32 %v359, %v360
  %v362 = vrot.slane %v361, 1
  %v363 = vadd.f32 %v361, %v362
  %v364 = vadd.f32 %v324, %v326
  %v365 = vrot.slane %v364, 4
  %v366 = vadd.f32 %v364, %v365
  %v367 = vrot.slane %v366, 2
  %v368 = vadd.f32 %v366, %v367
  %v369 = vrot.slane %v368, 1
  %v370 = vadd.f32 %v368, %v369
  %v371 = vadd.f32 %v328, %v330
  %v372 = vrot.slane %v371, 4
  %v373 = vadd.f32 %v371, %v372
  %v374 = vrot.slane %v373, 2
  %v375 = vadd.f32 %v373, %v374
  %v376 = vrot.slane %v375, 1
  %v377 = vadd.f32 %v375, %v376
  %v378 = vadd.f32 %v332, %v334
  %v379 = vrot.slane %v378, 4
  %v380 = vadd.f32 %v378, %v379
  %v381 = vrot.slane %v380, 2
  %v382 = vadd.f32 %v380, %v381
  %v383 = vrot.slane %v382, 1
  %v384 = vadd.f32 %v382, %v383
  %v385 = vadd.f32 %v336, %v338
  %v386 = vrot.slane %v385, 4
  %v387 = vadd.f32 %v385, %v386
  %v388 = vrot.slane %v387, 2
  %v389 = vadd.f32 %v387, %v388
  %v390 = vrot.slane %v389, 1
  %v391 = vadd.f32 %v389, %v390
  %v392 = vadd.f32 %v340, %v342
  %v393 = vrot.slane %v392, 4
  %v394 = vadd.f32 %v392, %v393
  %v395 = vrot.slane %v394, 2
  %v396 = vadd.f32 %v394, %v395
  %v397 = vrot.slane %v396, 1
  %v398 = vadd.f32 %v396, %v397
  %v399 = vrcp.pop %v349
  %v400 = vrcp.pop %v356
  %v401 = vrcp.pop %v363
  %v402 = vrcp.pop %v370
  %v403 = vrcp.pop %v377
  %v404 = vrcp.pop %v384
  %v405 = vrcp.pop %v391
  %v406 = vrcp.pop %v398
  %v407 = vmul.f32 %v312, %v399
  %v408 = vmul.f32 %v314, %v399
  %v409 = vmul.f32 %v316, %v400
  %v410 = vmul.f32 %v318, %v400
  %v411 = vmul.f32 %v320, %v401
  %v412 = vmul.f32 %v322, %v401
  %v413 = vmul.f32 %v324, %v402
  %v414 = vmul.f32 %v326, %v402
  %v415 = vmul.f32 %v328, %v403
  %v416 = vmul.f32 %v330, %v403
  %v417 = vmul.f32 %v332, %v404
  %v418 = vmul.f32 %v334, %v404
  %v419 = vmul.f32 %v336, %v405
  %v420 = vmul.f32 %v338, %v405
  %v421 = vmul.f32 %v340, %v406
  %v422 = vmul.f32 %v342, %v406
  %v423 = vld [vmem:[%s3] sm:$0x1]
  %v424 = vld [vmem:[%s3 + $0x1] sm:$0x1]
  %v425 = vld [vmem:[%s3 + $0x2] sm:$0x1]
  %v426 = vld [vmem:[%s3 + $0x3] sm:$0x1]
  %v427 = vld [vmem:[%s3 + $0x4] sm:$0x1]
  %v428 = vld [vmem:[%s3 + $0x5] sm:$0x1]
  %v429 = vld [vmem:[%s3 + $0x6] sm:$0x1]
  %v430 = vld [vmem:[%s3 + $0x7] sm:$0x1]
  %v431 = vsub.f32 0.0, %v423
  %v432 = vsub.f32 0.0, %v424
  %v433 = vsub.f32 0.0, %v425
  %v434 = vsub.f32 0.0, %v426
  %v435 = vsub.f32 0.0, %v427
  %v436 = vsub.f32 0.0, %v428
  %v437 = vsub.f32 0.0, %v429
  %v438 = vsub.f32 0.0, %v430
  %v439 = vmul.f32 %v431, 1.442695
  %v440 = vpow.pop %v439
  %v441 = vmul.f32 %v432, 1.442695
  %v442 = vpow.pop %v441
  %v443 = vmul.f32 %v433, 1.442695
  %v444 = vpow.pop %v443
  %v445 = vmul.f32 %v434, 1.442695
  %v446 = vpow.pop %v445
  %v447 = vmul.f32 %v435, 1.442695
  %v448 = vpow.pop %v447
  %v449 = vmul.f32 %v436, 1.442695
  %v450 = vpow.pop %v449
  %v451 = vmul.f32 %v437, 1.442695
  %v452 = vpow.pop %v451
  %v453 = vmul.f32 %v438, 1.442695
  %v454 = vpow.pop %v453
  %v455 = vadd.f32 %v440, 1.0
  %v456 = vadd.f32 %v442, 1.0
  %v457 = vadd.f32 %v444, 1.0
  %v458 = vadd.f32 %v446, 1.0
  %v459 = vadd.f32 %v448, 1.0
  %v460 = vadd.f32 %v450, 1.0
  %v461 = vadd.f32 %v452, 1.0
  %v462 = vadd.f32 %v454, 1.0
  %v463 = vrcp.pop %v455
  %v464 = vrcp.pop %v456
  %v465 = vrcp.pop %v457
  %v466 = vrcp.pop %v458
  %v467 = vrcp.pop %v459
  %v468 = vrcp.pop %v460
  %v469 = vrcp.pop %v461
  %v470 = vrcp.pop %v462
  %v471 = vmul.f32 %v207, %v407
  %v472 = vmul.f32 %v208, %v408
  %v473 = vmul.f32 %v209, %v409
  %v474 = vmul.f32 %v210, %v410
  %v475 = vmul.f32 %v211, %v411
  %v476 = vmul.f32 %v212, %v412
  %v477 = vmul.f32 %v213, %v413
  %v478 = vmul.f32 %v214, %v414
  %v479 = vmul.f32 %v215, %v415
  %v480 = vmul.f32 %v216, %v416
  %v481 = vmul.f32 %v217, %v417
  %v482 = vmul.f32 %v218, %v418
  %v483 = vmul.f32 %v219, %v419
  %v484 = vmul.f32 %v220, %v420
  %v485 = vmul.f32 %v221, %v421
  %v486 = vmul.f32 %v222, %v422
  %v487 = vadd.f32 %v471, %v472
  %v488 = vrot.slane %v487, 4
  %v489 = vadd.f32 %v487, %v488
  %v490 = vrot.slane %v489, 2
  %v491 = vadd.f32 %v489, %v490
  %v492 = vrot.slane %v491, 1
  %v493 = vadd.f32 %v491, %v492
  %v494 = vadd.f32 %v473, %v474
  %v495 = vrot.slane %v494, 4
  %v496 = vadd.f32 %v494, %v495
  %v497 = vrot.slane %v496, 2
  %v498 = vadd.f32 %v496, %v497
  %v499 = vrot.slane %v498, 1
  %v500 = vadd.f32 %v498, %v499
  %v501 = vadd.f32 %v475, %v476
  %v502 = vrot.slane %v501, 4
  %v503 = vadd.f32 %v501, %v502
  %v504 = vrot.slane %v503, 2
  %v505 = vadd.f32 %v503, %v504
  %v506 = vrot.slane %v505, 1
  %v507 = vadd.f32 %v505, %v506
  %v508 = vadd.f32 %v477, %v478
  %v509 = vrot.slane %v508, 4
  %v510 = vadd.f32 %v508, %v509
  %v511 = vrot.slane %v510, 2
  %v512 = vadd.f32 %v510, %v511
  %v513 = vrot.slane %v512, 1
  %v514 = vadd.f32 %v512, %v513
  %v515 = vadd.f32 %v479, %v480
  %v516 = vrot.slane %v515, 4
  %v517 = vadd.f32 %v515, %v516
  %v518 = vrot.slane %v517, 2
  %v519 = vadd.f32 %v517, %v518
  %v520 = vrot.slane %v519, 1
  %v521 = vadd.f32 %v519, %v520
  %v522 = vadd.f32 %v481, %v482
  %v523 = vrot.slane %v522, 4
  %v524 = vadd.f32 %v522, %v523
  %v525 = vrot.slane %v524, 2
  %v526 = vadd.f32 %v524, %v525
  %v527 = vrot.slane %v526, 1
  %v528 = vadd.f32 %v526, %v527
  %v529 = vadd.f32 %v483, %v484
  %v530 = vrot.slane %v529, 4
  %v531 = vadd.f32 %v529, %v530
  %v532 = vrot.slane %v531, 2
  %v533 = vadd.f32 %v531, %v532
  %v534 = vrot.slane %v533, 1
  %v535 = vadd.f32 %v533, %v534
  %v536 = vadd.f32 %v485, %v486
  %v537 = vrot.slane %v536, 4
  %v538 = vadd.f32 %v536, %v537
  %v539 = vrot.slane %v538, 2
  %v540 = vadd.f32 %v538, %v539
  %v541 = vrot.slane %v540, 1
  %v542 = vadd.f32 %v540, %v541
  %v543 = vld [vmem:[%s2] sm:$0x1]
  %v544 = vld [vmem:[%s2 + $0x1] sm:$0x1]
  %v545 = vld [vmem:[%s2 + $0x2] sm:$0x1]
  %v546 = vld [vmem:[%s2 + $0x3] sm:$0x1]
  %v547 = vld [vmem:[%s2 + $0x4] sm:$0x1]
  %v548 = vld [vmem:[%s2 + $0x5] sm:$0x1]
  %v549 = vld [vmem:[%s2 + $0x6] sm:$0x1]
  %v550 = vld [vmem:[%s2 + $0x7] sm:$0x1]
  %v551 = vld [vmem:[#allocation2] sm:$0xff]
  %v552 = vld [vmem:[#allocation2 + $0x8] sm:$0xff]
  %v553 = vmul.f32 %v551, %v407
  %v554 = vmul.f32 %v552, %v408
  %v555 = vadd.f32 %v553, %v554
  %v556 = vrot.slane %v555, 4
  %v557 = vadd.f32 %v555, %v556
  %v558 = vrot.slane %v557, 2
  %v559 = vadd.f32 %v557, %v558
  %v560 = vrot.slane %v559, 1
  %v561 = vadd.f32 %v559, %v560
  %v562 = vmul.f32 %v551, %v207
  %v563 = vmul.f32 %v552, %v208
  %v564 = vadd.f32 %v562, %v563
  %v565 = vrot.slane %v564, 4
  %v566 = vadd.f32 %v564, %v565
  %v567 = vrot.slane %v566, 2
  %v568 = vadd.f32 %v566, %v567
  %v569 = vrot.slane %v568, 1
  %v570 = vadd.f32 %v568, %v569
  %v571 = vsub.f32 %v543, %v561
  %v572 = vmul.f32 %v463, %v571
  %v573 = vmul.f32 %v572, %v493
  %v574 = vadd.f32 %v570, %v573
  %575 = vst [vmem:[%s4] sm:$0x1] %v574
  %v577 = vlaneseq
  %v578 = vshrl.u32 %v577, 7
  %v579 = vsub.s32 0, %v578
  %v580 = vrot.slane %v572, %v579
  %v582 = vmul.f32 %v407, %v580
  %v583 = vmul.f32 %v408, %v580
  %v584 = vadd.f32 %v551, %v582
  %v585 = vadd.f32 %v552, %v583
  %v586 = vmul.f32 %v584, %v409
  %v587 = vmul.f32 %v585, %v410
  %v588 = vadd.f32 %v586, %v587
  %v589 = vrot.slane %v588, 4
  %v590 = vadd.f32 %v588, %v589
  %v591 = vrot.slane %v590, 2
  %v592 = vadd.f32 %v590, %v591
  %v593 = vrot.slane %v592, 1
  %v594 = vadd.f32 %v592, %v593
  %v595 = vmul.f32 %v584, %v209
  %v596 = vmul.f32 %v585, %v210
  %v597 = vadd.f32 %v595, %v596
  %v598 = vrot.slane %v597, 4
  %v599 = vadd.f32 %v597, %v598
  %v600 = vrot.slane %v599, 2
  %v601 = vadd.f32 %v599, %v600
  %v602 = vrot.slane %v601, 1
  %v603 = vadd.f32 %v601, %v602
  %v604 = vsub.f32 %v544, %v594
  %v605 = vmul.f32 %v464, %v604
  %v606 = vmul.f32 %v605, %v500
  %v607 = vadd.f32 %v603, %v606
  %s608 = scalar_lea.vmem %s4, 1
  %609 = vst [vmem:[%s608] sm:$0x1] %v607
  %v611 = vlaneseq
  %v612 = vshrl.u32 %v611, 7
  %v613 = vsub.s32 0, %v612
  %v614 = vrot.slane %v605, %v613
  %v616 = vmul.f32 %v409, %v614
  %v617 = vmul.f32 %v410, %v614
  %v618 = vadd.f32 %v584, %v616
  %v619 = vadd.f32 %v585, %v617
  %v620 = vmul.f32 %v618, %v411
  %v621 = vmul.f32 %v619, %v412
  %v622 = vadd.f32 %v620, %v621
  %v623 = vrot.slane %v622, 4
  %v624 = vadd.f32 %v622, %v623
  %v625 = vrot.slane %v624, 2
  %v626 = vadd.f32 %v624, %v625
  %v627 = vrot.slane %v626, 1
  %v628 = vadd.f32 %v626, %v627
  %v629 = vmul.f32 %v618, %v211
  %v630 = vmul.f32 %v619, %v212
  %v631 = vadd.f32 %v629, %v630
  %v632 = vrot.slane %v631, 4
  %v633 = vadd.f32 %v631, %v632
  %v634 = vrot.slane %v633, 2
  %v635 = vadd.f32 %v633, %v634
  %v636 = vrot.slane %v635, 1
  %v637 = vadd.f32 %v635, %v636
  %v638 = vsub.f32 %v545, %v628
  %v639 = vmul.f32 %v465, %v638
  %v640 = vmul.f32 %v639, %v507
  %v641 = vadd.f32 %v637, %v640
  %s642 = scalar_lea.vmem %s4, 2
  %643 = vst [vmem:[%s642] sm:$0x1] %v641
  %v645 = vlaneseq
  %v646 = vshrl.u32 %v645, 7
  %v647 = vsub.s32 0, %v646
  %v648 = vrot.slane %v639, %v647
  %v650 = vmul.f32 %v411, %v648
  %v651 = vmul.f32 %v412, %v648
  %v652 = vadd.f32 %v618, %v650
  %v653 = vadd.f32 %v619, %v651
  %v654 = vmul.f32 %v652, %v413
  %v655 = vmul.f32 %v653, %v414
  %v656 = vadd.f32 %v654, %v655
  %v657 = vrot.slane %v656, 4
  %v658 = vadd.f32 %v656, %v657
  %v659 = vrot.slane %v658, 2
  %v660 = vadd.f32 %v658, %v659
  %v661 = vrot.slane %v660, 1
  %v662 = vadd.f32 %v660, %v661
  %v663 = vmul.f32 %v652, %v213
  %v664 = vmul.f32 %v653, %v214
  %v665 = vadd.f32 %v663, %v664
  %v666 = vrot.slane %v665, 4
  %v667 = vadd.f32 %v665, %v666
  %v668 = vrot.slane %v667, 2
  %v669 = vadd.f32 %v667, %v668
  %v670 = vrot.slane %v669, 1
  %v671 = vadd.f32 %v669, %v670
  %v672 = vsub.f32 %v546, %v662
  %v673 = vmul.f32 %v466, %v672
  %v674 = vmul.f32 %v673, %v514
  %v675 = vadd.f32 %v671, %v674
  %s676 = scalar_lea.vmem %s4, 3
  %677 = vst [vmem:[%s676] sm:$0x1] %v675
  %v679 = vlaneseq
  %v680 = vshrl.u32 %v679, 7
  %v681 = vsub.s32 0, %v680
  %v682 = vrot.slane %v673, %v681
  %v684 = vmul.f32 %v413, %v682
  %v685 = vmul.f32 %v414, %v682
  %v686 = vadd.f32 %v652, %v684
  %v687 = vadd.f32 %v653, %v685
  %v688 = vmul.f32 %v686, %v415
  %v689 = vmul.f32 %v687, %v416
  %v690 = vadd.f32 %v688, %v689
  %v691 = vrot.slane %v690, 4
  %v692 = vadd.f32 %v690, %v691
  %v693 = vrot.slane %v692, 2
  %v694 = vadd.f32 %v692, %v693
  %v695 = vrot.slane %v694, 1
  %v696 = vadd.f32 %v694, %v695
  %v697 = vmul.f32 %v686, %v215
  %v698 = vmul.f32 %v687, %v216
  %v699 = vadd.f32 %v697, %v698
  %v700 = vrot.slane %v699, 4
  %v701 = vadd.f32 %v699, %v700
  %v702 = vrot.slane %v701, 2
  %v703 = vadd.f32 %v701, %v702
  %v704 = vrot.slane %v703, 1
  %v705 = vadd.f32 %v703, %v704
  %v706 = vsub.f32 %v547, %v696
  %v707 = vmul.f32 %v467, %v706
  %v708 = vmul.f32 %v707, %v521
  %v709 = vadd.f32 %v705, %v708
  %s710 = scalar_lea.vmem %s4, 4
  %711 = vst [vmem:[%s710] sm:$0x1] %v709
  %v713 = vlaneseq
  %v714 = vshrl.u32 %v713, 7
  %v715 = vsub.s32 0, %v714
  %v716 = vrot.slane %v707, %v715
  %v718 = vmul.f32 %v415, %v716
  %v719 = vmul.f32 %v416, %v716
  %v720 = vadd.f32 %v686, %v718
  %v721 = vadd.f32 %v687, %v719
  %v722 = vmul.f32 %v720, %v417
  %v723 = vmul.f32 %v721, %v418
  %v724 = vadd.f32 %v722, %v723
  %v725 = vrot.slane %v724, 4
  %v726 = vadd.f32 %v724, %v725
  %v727 = vrot.slane %v726, 2
  %v728 = vadd.f32 %v726, %v727
  %v729 = vrot.slane %v728, 1
  %v730 = vadd.f32 %v728, %v729
  %v731 = vmul.f32 %v720, %v217
  %v732 = vmul.f32 %v721, %v218
  %v733 = vadd.f32 %v731, %v732
  %v734 = vrot.slane %v733, 4
  %v735 = vadd.f32 %v733, %v734
  %v736 = vrot.slane %v735, 2
  %v737 = vadd.f32 %v735, %v736
  %v738 = vrot.slane %v737, 1
  %v739 = vadd.f32 %v737, %v738
  %v740 = vsub.f32 %v548, %v730
  %v741 = vmul.f32 %v468, %v740
  %v742 = vmul.f32 %v741, %v528
  %v743 = vadd.f32 %v739, %v742
  %s744 = scalar_lea.vmem %s4, 5
  %745 = vst [vmem:[%s744] sm:$0x1] %v743
  %v747 = vlaneseq
  %v748 = vshrl.u32 %v747, 7
  %v749 = vsub.s32 0, %v748
  %v750 = vrot.slane %v741, %v749
  %v752 = vmul.f32 %v417, %v750
  %v753 = vmul.f32 %v418, %v750
  %v754 = vadd.f32 %v720, %v752
  %v755 = vadd.f32 %v721, %v753
  %v756 = vmul.f32 %v754, %v419
  %v757 = vmul.f32 %v755, %v420
  %v758 = vadd.f32 %v756, %v757
  %v759 = vrot.slane %v758, 4
  %v760 = vadd.f32 %v758, %v759
  %v761 = vrot.slane %v760, 2
  %v762 = vadd.f32 %v760, %v761
  %v763 = vrot.slane %v762, 1
  %v764 = vadd.f32 %v762, %v763
  %v765 = vmul.f32 %v754, %v219
  %v766 = vmul.f32 %v755, %v220
  %v767 = vadd.f32 %v765, %v766
  %v768 = vrot.slane %v767, 4
  %v769 = vadd.f32 %v767, %v768
  %v770 = vrot.slane %v769, 2
  %v771 = vadd.f32 %v769, %v770
  %v772 = vrot.slane %v771, 1
  %v773 = vadd.f32 %v771, %v772
  %v774 = vsub.f32 %v549, %v764
  %v775 = vmul.f32 %v469, %v774
  %v776 = vmul.f32 %v775, %v535
  %v777 = vadd.f32 %v773, %v776
  %s778 = scalar_lea.vmem %s4, 6
  %779 = vst [vmem:[%s778] sm:$0x1] %v777
  %v781 = vlaneseq
  %v782 = vshrl.u32 %v781, 7
  %v783 = vsub.s32 0, %v782
  %v784 = vrot.slane %v775, %v783
  %v786 = vmul.f32 %v419, %v784
  %v787 = vmul.f32 %v420, %v784
  %v788 = vadd.f32 %v754, %v786
  %v789 = vadd.f32 %v755, %v787
  %v790 = vmul.f32 %v788, %v421
  %v791 = vmul.f32 %v789, %v422
  %v792 = vadd.f32 %v790, %v791
  %v793 = vrot.slane %v792, 4
  %v794 = vadd.f32 %v792, %v793
  %v795 = vrot.slane %v794, 2
  %v796 = vadd.f32 %v794, %v795
  %v797 = vrot.slane %v796, 1
  %v798 = vadd.f32 %v796, %v797
  %v799 = vmul.f32 %v788, %v221
  %v800 = vmul.f32 %v789, %v222
  %v801 = vadd.f32 %v799, %v800
  %v802 = vrot.slane %v801, 4
  %v803 = vadd.f32 %v801, %v802
  %v804 = vrot.slane %v803, 2
  %v805 = vadd.f32 %v803, %v804
  %v806 = vrot.slane %v805, 1
  %v807 = vadd.f32 %v805, %v806
  %v808 = vsub.f32 %v550, %v798
  %v809 = vmul.f32 %v470, %v808
  %v810 = vmul.f32 %v809, %v542
  %v811 = vadd.f32 %v807, %v810
  %s812 = scalar_lea.vmem %s4, 7
  %813 = vst [vmem:[%s812] sm:$0x1] %v811
  %v815 = vlaneseq
  %v816 = vshrl.u32 %v815, 7
  %v817 = vsub.s32 0, %v816
  %v818 = vrot.slane %v809, %v817
  %v820 = vmul.f32 %v421, %v818
  %v821 = vmul.f32 %v422, %v818
  %v822 = vadd.f32 %v788, %v820
  %v823 = vadd.f32 %v789, %v821
  %824 = vst [vmem:[#allocation2] sm:$0xff] %v822
  %825 = vst [vmem:[#allocation2 + $0x8] sm:$0xff] %v823
  // Predicated region
  $region22: #{_lambda_.10} parent=0 // pred_check
    _
  $region23: #{_lambda_.10} parent=0 // pred_check_branch
    %827 = sbr.rel (0) target = $region25
  $region24: #{_lambda_.10} parent=0 // pred_region
    _
  $region25: #{_lambda_.10} parent=0 // pred_fallthru
    _
  // Predicated region
  $region26: #{_lambda_.10} parent=0 // pred_check
    _
  $region27: #{_lambda_.10} parent=0 // pred_check_branch
    %829 = sbr.rel (0) target = $region29
  $region28: #{_lambda_.10} parent=0 // pred_region
    _
  $region29: #{_lambda_.10} parent=0 // pred_fallthru
    _

// kernel: _lambda_.15
$region0: #{_lambda_.15}
  #allocation0 [shape = 'u32[]', space=smem, size = 0x4, offset = 0x4, fixed_abs, tag = 'smem constant byte address 0x4 - core index']
  #allocation1 [shape = 'u32[144,128]{1,0:T(1,128)}', space=vmem, size = 0x12000, scoped, tag = 'internal scratch']
  %s0 = inlined_call_operand.vmem [shape: f32[16,64], index: 0, kind: input, shape index: {}]
  %s1 = inlined_call_operand.vmem [shape: f32[64,128], index: 1, kind: input, shape index: {}]
  %s2 = inlined_call_operand.vmem [shape: f32[1,128], index: 2, kind: input, shape index: {}]
  %s3 = inlined_call_operand.vmem [shape: f32[16,128], index: 3, kind: output, shape index: {}]
  %s4 = sld [smem:[#allocation0]]
  $region22: #{_lambda_.15} parent=0
    _
  %s6 = ssub.s32 1, %s4
  %s7 = scalar_select 0, %s6, %s4
  // Predicated region
  $region2: #{_lambda_.15} parent=0 // pred_check
    _
  $region3: #{_lambda_.15} parent=0 // pred_check_branch
    %9 = sbr.rel (0) target = $region5
  $region4: #{_lambda_.15} parent=0 // pred_region
    _
  $region5: #{_lambda_.15} parent=0 // pred_fallthru
    _
  // Predicated region
  $region6: #{_lambda_.15} parent=0 // pred_check
    _
  $region7: #{_lambda_.15} parent=0 // pred_check_branch
    %11 = sbr.rel (0) target = $region9
  $region8: #{_lambda_.15} parent=0 // pred_region
    _
  $region9: #{_lambda_.15} parent=0 // pred_fallthru
    _
  // Predicated region
  $region10: #{_lambda_.15} parent=0 // pred_check
    _
  $region11: #{_lambda_.15} parent=0 // pred_check_branch
    %13 = sbr.rel (0) target = $region13
  $region12: #{_lambda_.15} parent=0 // pred_region
    _
  $region13: #{_lambda_.15} parent=0 // pred_fallthru
    _
  %v15 = vld [vmem:[%s0] sm:$0xff]
  %v16 = vld [vmem:[%s0 + $0x8] sm:$0xff]
  %v17 = vld [vmem:[%s1] sm:$0xff]
  %v18 = vld [vmem:[%s1 + $0x8] sm:$0xff]
  %v19 = vld [vmem:[%s1 + $0x10] sm:$0xff]
  %v20 = vld [vmem:[%s1 + $0x18] sm:$0xff]
  %v21 = vld [vmem:[%s1 + $0x20] sm:$0xff]
  %v22 = vld [vmem:[%s1 + $0x28] sm:$0xff]
  %v23 = vld [vmem:[%s1 + $0x30] sm:$0xff]
  %v24 = vld [vmem:[%s1 + $0x38] sm:$0xff]
  %v25 = vpack.c.bf16 %v16, %v15
  %v26 = vpack.c.bf16 %v18, %v17
  %v27 = vpack.c.bf16 %v20, %v19
  %v28 = vpack.c.bf16 %v22, %v21
  %v29 = vpack.c.bf16 %v24, %v23
  %v30 = vld [vmem:[%s2] sm:$0x1]
  %v32 = vlaneseq
  %v33 = vshrl.u32 %v32, 7
  %v34 = vsub.s32 0, %v33
  %v35 = vrot.slane %v30, %v34
  %vm37 = vcmask 523264
  %v39 = vsel %vm37, %v25, 0
  %41 = vmatprep.subr.bf16.mxu0 0
  %42 = vmatpush1.bf16.msra.mxu0 0
  %43 = vmatprep.subr.bf16.mxu0 0
  %44 = vmatpush1.bf16.msra.mxu0 0
  %45 = vmatprep.subr.bf16.mxu0 0
  %46 = vmatpush1.bf16.msra.mxu0 0
  %47 = vmatprep.subr.bf16.mxu0 0
  %48 = vmatpush1.bf16.msra.mxu0 0
  %49 = vmatprep.subr.bf16.mxu0 0
  %50 = vmatpush1.bf16.msra.mxu0 %v29
  %51 = vmatprep.subr.bf16.mxu0 0
  %52 = vmatpush1.bf16.msra.mxu0 %v28
  %53 = vmatprep.subr.bf16.mxu0 0
  %54 = vmatpush1.bf16.msra.mxu0 %v27
  %55 = vmatprep.subr.bf16.mxu0 0
  %56 = vmatpush1.bf16.msra.mxu0 %v26
  %57 = vmatprep.subr.bf16.mxu0 0
  %58 = vmatpush2.bf16.msra.mxu0 0
  %59 = vmatprep.subr.bf16.mxu0 0
  %60 = vmatpush2.bf16.msra.mxu0 0
  %61 = vmatprep.subr.bf16.mxu0 0
  %62 = vmatpush2.bf16.msra.mxu0 0
  %63 = vmatprep.subr.bf16.mxu0 0
  %64 = vmatpush2.bf16.msra.mxu0 0
  %65 = vmatprep.subr.bf16.mxu0 0
  %66 = vmatpush2.bf16.msra.mxu0 0
  %67 = vmatprep.subr.bf16.mxu0 0
  %68 = vmatpush2.bf16.msra.mxu0 0
  %69 = vmatprep.subr.bf16.mxu0 0
  %70 = vmatpush2.bf16.msra.mxu0 0
  %71 = vmatprep.subr.bf16.mxu0 0
  %72 = vmatpush2.bf16.msra.mxu0 0
  %73 = vmatprep.mubr.bf16.mxu0 0
  %74 = vmatmul.mubr.bf16.gmra.mxu0 %v39
  %v75 = vpop.f32.mrf.mxu0
  %v76 = vadd.f32 %v35, %v75
  %v77 = vpop.f32.mrf.mxu0
  %v78 = vpop.f32.mrf.mxu0
  %v79 = vadd.f32 %v35, %v78
  %v80 = vpop.f32.mrf.mxu0
  %81 = vdwg.mxu0
  %82 = vst [vmem:[%s3] sm:$0xff] %v76
  %83 = vst [vmem:[%s3 + $0x8] sm:$0xff] %v79
  // Predicated region
  $region14: #{_lambda_.15} parent=0 // pred_check
    _
  $region15: #{_lambda_.15} parent=0 // pred_check_branch
    %85 = sbr.rel (0) target = $region17
  $region16: #{_lambda_.15} parent=0 // pred_region
    _
  $region17: #{_lambda_.15} parent=0 // pred_fallthru
    _
  // Predicated region
  $region18: #{_lambda_.15} parent=0 // pred_check
    _
  $region19: #{_lambda_.15} parent=0 // pred_check_branch
    %87 = sbr.rel (0) target = $region21
  $region20: #{_lambda_.15} parent=0 // pred_region
    _
  $region21: #{_lambda_.15} parent=0 // pred_fallthru
    _

// kernel: _lambda_.11
$region0: #{_lambda_.11}
  #allocation0 [shape = 'u32[]', space=smem, size = 0x4, offset = 0x4, fixed_abs, tag = 'smem constant byte address 0x4 - core index']
  #allocation1 [shape = 'u32[144,128]{1,0:T(1,128)}', space=vmem, size = 0x12000, scoped, tag = 'internal scratch']
  %s0 = inlined_call_operand.vmem [shape: f32[16,64], index: 0, kind: input, shape index: {}]
  %s1 = inlined_call_operand.vmem [shape: f32[16,64], index: 1, kind: input, shape index: {}]
  %s2 = inlined_call_operand.vmem [shape: f32[64,64], index: 2, kind: input, shape index: {}]
  %s3 = inlined_call_operand.vmem [shape: f32[1,64], index: 3, kind: input, shape index: {}]
  %s4 = inlined_call_operand.vmem [shape: f32[1,64], index: 4, kind: input, shape index: {}]
  %s5 = inlined_call_operand.vmem [shape: f32[64,128], index: 5, kind: input, shape index: {}]
  %s6 = inlined_call_operand.vmem [shape: f32[1,128], index: 6, kind: input, shape index: {}]
  %s7 = inlined_call_operand.vmem [shape: f32[128,64], index: 7, kind: input, shape index: {}]
  %s8 = inlined_call_operand.vmem [shape: f32[1,64], index: 8, kind: input, shape index: {}]
  %s9 = inlined_call_operand.vmem [shape: f32[16,64], index: 9, kind: output, shape index: {}]
  %s10 = sld [smem:[#allocation0]]
  $region46: #{_lambda_.11} parent=0
    _
  %s12 = ssub.s32 1, %s10
  %s13 = scalar_select 0, %s12, %s10
  // Predicated region
  $region2: #{_lambda_.11} parent=0 // pred_check
    _
  $region3: #{_lambda_.11} parent=0 // pred_check_branch
    %15 = sbr.rel (0) target = $region5
  $region4: #{_lambda_.11} parent=0 // pred_region
    _
  $region5: #{_lambda_.11} parent=0 // pred_fallthru
    _
  // Predicated region
  $region6: #{_lambda_.11} parent=0 // pred_check
    _
  $region7: #{_lambda_.11} parent=0 // pred_check_branch
    %17 = sbr.rel (0) target = $region9
  $region8: #{_lambda_.11} parent=0 // pred_region
    _
  $region9: #{_lambda_.11} parent=0 // pred_fallthru
    _
  // Predicated region
  $region10: #{_lambda_.11} parent=0 // pred_check
    _
  $region11: #{_lambda_.11} parent=0 // pred_check_branch
    %19 = sbr.rel (0) target = $region13
  $region12: #{_lambda_.11} parent=0 // pred_region
    _
  $region13: #{_lambda_.11} parent=0 // pred_fallthru
    _
  // Predicated region
  $region14: #{_lambda_.11} parent=0 // pred_check
    _
  $region15: #{_lambda_.11} parent=0 // pred_check_branch
    %21 = sbr.rel (0) target = $region17
  $region16: #{_lambda_.11} parent=0 // pred_region
    _
  $region17: #{_lambda_.11} parent=0 // pred_fallthru
    _
  // Predicated region
  $region18: #{_lambda_.11} parent=0 // pred_check
    _
  $region19: #{_lambda_.11} parent=0 // pred_check_branch
    %23 = sbr.rel (0) target = $region21
  $region20: #{_lambda_.11} parent=0 // pred_region
    _
  $region21: #{_lambda_.11} parent=0 // pred_fallthru
    _
  // Predicated region
  $region22: #{_lambda_.11} parent=0 // pred_check
    _
  $region23: #{_lambda_.11} parent=0 // pred_check_branch
    %25 = sbr.rel (0) target = $region25
  $region24: #{_lambda_.11} parent=0 // pred_region
    _
  $region25: #{_lambda_.11} parent=0 // pred_fallthru
    _
  // Predicated region
  $region26: #{_lambda_.11} parent=0 // pred_check
    _
  $region27: #{_lambda_.11} parent=0 // pred_check_branch
    %27 = sbr.rel (0) target = $region29
  $region28: #{_lambda_.11} parent=0 // pred_region
    _
  $region29: #{_lambda_.11} parent=0 // pred_fallthru
    _
  // Predicated region
  $region30: #{_lambda_.11} parent=0 // pred_check
    _
  $region31: #{_lambda_.11} parent=0 // pred_check_branch
    %29 = sbr.rel (0) target = $region33
  $region32: #{_lambda_.11} parent=0 // pred_region
    _
  $region33: #{_lambda_.11} parent=0 // pred_fallthru
    _
  // Predicated region
  $region34: #{_lambda_.11} parent=0 // pred_check
    _
  $region35: #{_lambda_.11} parent=0 // pred_check_branch
    %31 = sbr.rel (0) target = $region37
  $region36: #{_lambda_.11} parent=0 // pred_region
    _
  $region37: #{_lambda_.11} parent=0 // pred_fallthru
    _
  %v33 = vld [vmem:[%s0] sm:$0xff]
  %v34 = vld [vmem:[%s0 + $0x8] sm:$0xff]
  %v35 = vld [vmem:[%s2] sm:$0xff]
  %v36 = vld [vmem:[%s2 + $0x8] sm:$0xff]
  %v37 = vld [vmem:[%s2 + $0x10] sm:$0xff]
  %v38 = vld [vmem:[%s2 + $0x18] sm:$0xff]
  %v39 = vld [vmem:[%s2 + $0x20] sm:$0xff]
  %v40 = vld [vmem:[%s2 + $0x28] sm:$0xff]
  %v41 = vld [vmem:[%s2 + $0x30] sm:$0xff]
  %v42 = vld [vmem:[%s2 + $0x38] sm:$0xff]
  %v43 = vpack.c.bf16 %v34, %v33
  %v44 = vpack.c.bf16 %v36, %v35
  %v45 = vpack.c.bf16 %v38, %v37
  %v46 = vpack.c.bf16 %v40, %v39
  %v47 = vpack.c.bf16 %v42, %v41
  %v48 = vld [vmem:[%s1] sm:$0xff]
  %v49 = vld [vmem:[%s1 + $0x8] sm:$0xff]
  %vm50 = vcmask 523264
  %v52 = vsel %vm50, %v43, 0
  %54 = vmatprep.subr.bf16.mxu0 0
  %55 = vmatpush1.bf16.msra.mxu0 0
  %56 = vmatprep.subr.bf16.mxu0 0
  %57 = vmatpush1.bf16.msra.mxu0 0
  %58 = vmatprep.subr.bf16.mxu0 0
  %59 = vmatpush1.bf16.msra.mxu0 0
  %60 = vmatprep.subr.bf16.mxu0 0
  %61 = vmatpush1.bf16.msra.mxu0 0
  %62 = vmatprep.subr.bf16.mxu0 0
  %63 = vmatpush1.bf16.msra.mxu0 %v47
  %64 = vmatprep.subr.bf16.mxu0 0
  %65 = vmatpush1.bf16.msra.mxu0 %v46
  %66 = vmatprep.subr.bf16.mxu0 0
  %67 = vmatpush1.bf16.msra.mxu0 %v45
  %68 = vmatprep.subr.bf16.mxu0 0
  %69 = vmatpush1.bf16.msra.mxu0 %v44
  %70 = vmatprep.subr.bf16.mxu0 0
  %71 = vmatpush2.bf16.msra.mxu0 0
  %72 = vmatprep.subr.bf16.mxu0 0
  %73 = vmatpush2.bf16.msra.mxu0 0
  %74 = vmatprep.subr.bf16.mxu0 0
  %75 = vmatpush2.bf16.msra.mxu0 0
  %76 = vmatprep.subr.bf16.mxu0 0
  %77 = vmatpush2.bf16.msra.mxu0 0
  %78 = vmatprep.subr.bf16.mxu0 0
  %79 = vmatpush2.bf16.msra.mxu0 0
  %80 = vmatprep.subr.bf16.mxu0 0
  %81 = vmatpush2.bf16.msra.mxu0 0
  %82 = vmatprep.subr.bf16.mxu0 0
  %83 = vmatpush2.bf16.msra.mxu0 0
  %84 = vmatprep.subr.bf16.mxu0 0
  %85 = vmatpush2.bf16.msra.mxu0 0
  %86 = vmatprep.mubr.bf16.mxu0 0
  %87 = vmatmul.mubr.bf16.gmra.mxu0 %v52
  %v88 = vpop.f32.mrf.mxu0
  %v89 = vadd.f32 %v48, %v88
  %v90 = vpop.f32.mrf.mxu0
  %v91 = vpop.f32.mrf.mxu0
  %v92 = vadd.f32 %v49, %v91
  %v93 = vpop.f32.mrf.mxu0
  %94 = vdwg.mxu0
  %v95 = vld [vmem:[%s3] sm:$0x1]
  %v96 = vld [vmem:[%s4] sm:$0x1]
  %v97 = vsel %vm50, %v89, 0.0
  %98 = vadd.xlane.f32.xlu0 %v97
  %v99 = vpop.xlane.xlu0 %98
  %v100 = vsel %vm50, %v92, 0.0
  %101 = vadd.xlane.f32.xlu0 %v100
  %v102 = vpop.xlane.xlu0 %101
  %v103 = vrcp.pop 64.0
  %v104 = vmul.f32 %v99, %v103
  %v105 = vmul.f32 %v102, %v103
  %v106 = vsub.f32 %v89, %v104
  %v107 = vsub.f32 %v92, %v105
  %v108 = vmul.f32 %v106, %v106
  %v109 = vmul.f32 %v107, %v107
  %v110 = vsel %vm50, %v108, 0.0
  %111 = vadd.xlane.f32.xlu0 %v110
  %v112 = vpop.xlane.xlu0 %111
  %v113 = vsel %vm50, %v109, 0.0
  %114 = vadd.xlane.f32.xlu0 %v113
  %v115 = vpop.xlane.xlu0 %114
  %v116 = vmul.f32 %v112, %v103
  %v117 = vmul.f32 %v115, %v103
  %v118 = vadd.f32 %v116, 1e-05
  %v119 = vadd.f32 %v117, 1e-05
  %v120 = vrsqrt.pop %v118
  %v121 = vrsqrt.pop %v119
  %v122 = vmul.f32 %v106, %v120
  %v123 = vmul.f32 %v107, %v121
  %v125 = vlaneseq
  %v126 = vshrl.u32 %v125, 7
  %v127 = vsub.s32 0, %v126
  %v128 = vrot.slane %v95, %v127
  %v130 = vmul.f32 %v122, %v128
  %v131 = vmul.f32 %v123, %v128
  %v133 = vlaneseq
  %v134 = vshrl.u32 %v133, 7
  %v135 = vsub.s32 0, %v134
  %v136 = vrot.slane %v96, %v135
  %v138 = vadd.f32 %v130, %v136
  %v139 = vadd.f32 %v131, %v136
  %v140 = vld [vmem:[%s5] sm:$0xff]
  %v141 = vld [vmem:[%s5 + $0x8] sm:$0xff]
  %v142 = vld [vmem:[%s5 + $0x10] sm:$0xff]
  %v143 = vld [vmem:[%s5 + $0x18] sm:$0xff]
  %v144 = vld [vmem:[%s5 + $0x20] sm:$0xff]
  %v145 = vld [vmem:[%s5 + $0x28] sm:$0xff]
  %v146 = vld [vmem:[%s5 + $0x30] sm:$0xff]
  %v147 = vld [vmem:[%s5 + $0x38] sm:$0xff]
  %v148 = vpack.c.bf16 %v139, %v138
  %v149 = vpack.c.bf16 %v141, %v140
  %v150 = vpack.c.bf16 %v143, %v142
  %v151 = vpack.c.bf16 %v145, %v144
  %v152 = vpack.c.bf16 %v147, %v146
  %v153 = vld [vmem:[%s6] sm:$0x1]
  %v155 = vlaneseq
  %v156 = vshrl.u32 %v155, 7
  %v157 = vsub.s32 0, %v156
  %v158 = vrot.slane %v153, %v157
  %v161 = vsel %vm50, %v148, 0
  %163 = vmatprep.subr.bf16.mxu0 0
  %164 = vmatpush1.bf16.msra.mxu0 0
  %165 = vmatprep.subr.bf16.mxu0 0
  %166 = vmatpush1.bf16.msra.mxu0 0
  %167 = vmatprep.subr.bf16.mxu0 0
  %168 = vmatpush1.bf16.msra.mxu0 0
  %169 = vmatprep.subr.bf16.mxu0 0
  %170 = vmatpush1.bf16.msra.mxu0 0
  %171 = vmatprep.subr.bf16.mxu0 0
  %172 = vmatpush1.bf16.msra.mxu0 %v152
  %173 = vmatprep.subr.bf16.mxu0 0
  %174 = vmatpush1.bf16.msra.mxu0 %v151
  %175 = vmatprep.subr.bf16.mxu0 0
  %176 = vmatpush1.bf16.msra.mxu0 %v150
  %177 = vmatprep.subr.bf16.mxu0 0
  %178 = vmatpush1.bf16.msra.mxu0 %v149
  %179 = vmatprep.subr.bf16.mxu0 0
  %180 = vmatpush2.bf16.msra.mxu0 0
  %181 = vmatprep.subr.bf16.mxu0 0
  %182 = vmatpush2.bf16.msra.mxu0 0
  %183 = vmatprep.subr.bf16.mxu0 0
  %184 = vmatpush2.bf16.msra.mxu0 0
  %185 = vmatprep.subr.bf16.mxu0 0
  %186 = vmatpush2.bf16.msra.mxu0 0
  %187 = vmatprep.subr.bf16.mxu0 0
  %188 = vmatpush2.bf16.msra.mxu0 0
  %189 = vmatprep.subr.bf16.mxu0 0
  %190 = vmatpush2.bf16.msra.mxu0 0
  %191 = vmatprep.subr.bf16.mxu0 0
  %192 = vmatpush2.bf16.msra.mxu0 0
  %193 = vmatprep.subr.bf16.mxu0 0
  %194 = vmatpush2.bf16.msra.mxu0 0
  %195 = vmatprep.mubr.bf16.mxu0 0
  %196 = vmatmul.mubr.bf16.gmra.mxu0 %v161
  %v197 = vpop.f32.mrf.mxu0
  %v198 = vadd.f32 %v158, %v197
  %v199 = vpop.f32.mrf.mxu0
  %v200 = vpop.f32.mrf.mxu0
  %v201 = vadd.f32 %v158, %v200
  %v202 = vpop.f32.mrf.mxu0
  %203 = vdwg.mxu0
  %v204 = vmax.f32 %v198, 0.0
  %v205 = vmax.f32 %v201, 0.0
  %v206 = vld [vmem:[%s7] sm:$0xff]
  %v207 = vld [vmem:[%s7 + $0x8] sm:$0xff]
  %v208 = vld [vmem:[%s7 + $0x10] sm:$0xff]
  %v209 = vld [vmem:[%s7 + $0x18] sm:$0xff]
  %v210 = vld [vmem:[%s7 + $0x20] sm:$0xff]
  %v211 = vld [vmem:[%s7 + $0x28] sm:$0xff]
  %v212 = vld [vmem:[%s7 + $0x30] sm:$0xff]
  %v213 = vld [vmem:[%s7 + $0x38] sm:$0xff]
  %v214 = vld [vmem:[%s7 + $0x40] sm:$0xff]
  %v215 = vld [vmem:[%s7 + $0x48] sm:$0xff]
  %v216 = vld [vmem:[%s7 + $0x50] sm:$0xff]
  %v217 = vld [vmem:[%s7 + $0x58] sm:$0xff]
  %v218 = vld [vmem:[%s7 + $0x60] sm:$0xff]
  %v219 = vld [vmem:[%s7 + $0x68] sm:$0xff]
  %v220 = vld [vmem:[%s7 + $0x70] sm:$0xff]
  %v221 = vld [vmem:[%s7 + $0x78] sm:$0xff]
  %v222 = vpack.c.bf16 %v205, %v204
  %v223 = vpack.c.bf16 %v207, %v206
  %v224 = vpack.c.bf16 %v209, %v208
  %v225 = vpack.c.bf16 %v211, %v210
  %v226 = vpack.c.bf16 %v213, %v212
  %v227 = vpack.c.bf16 %v215, %v214
  %v228 = vpack.c.bf16 %v217, %v216
  %v229 = vpack.c.bf16 %v219, %v218
  %v230 = vpack.c.bf16 %v221, %v220
  %v231 = vld [vmem:[%s8] sm:$0x1]
  %v233 = vlaneseq
  %v234 = vshrl.u32 %v233, 7
  %v235 = vsub.s32 0, %v234
  %v236 = vrot.slane %v231, %v235
  %238 = vmatprep.subr.bf16.mxu0 0
  %239 = vmatpush1.bf16.msra.mxu0 %v230
  %240 = vmatprep.subr.bf16.mxu0 0
  %241 = vmatpush1.bf16.msra.mxu0 %v229
  %242 = vmatprep.subr.bf16.mxu0 0
  %243 = vmatpush1.bf16.msra.mxu0 %v228
  %244 = vmatprep.subr.bf16.mxu0 0
  %245 = vmatpush1.bf16.msra.mxu0 %v227
  %246 = vmatprep.subr.bf16.mxu0 0
  %247 = vmatpush1.bf16.msra.mxu0 %v226
  %248 = vmatprep.subr.bf16.mxu0 0
  %249 = vmatpush1.bf16.msra.mxu0 %v225
  %250 = vmatprep.subr.bf16.mxu0 0
  %251 = vmatpush1.bf16.msra.mxu0 %v224
  %252 = vmatprep.subr.bf16.mxu0 0
  %253 = vmatpush1.bf16.msra.mxu0 %v223
  %254 = vmatprep.subr.bf16.mxu0 0
  %255 = vmatpush2.bf16.msra.mxu0 0
  %256 = vmatprep.subr.bf16.mxu0 0
  %257 = vmatpush2.bf16.msra.mxu0 0
  %258 = vmatprep.subr.bf16.mxu0 0
  %259 = vmatpush2.bf16.msra.mxu0 0
  %260 = vmatprep.subr.bf16.mxu0 0
  %261 = vmatpush2.bf16.msra.mxu0 0
  %262 = vmatprep.subr.bf16.mxu0 0
  %263 = vmatpush2.bf16.msra.mxu0 0
  %264 = vmatprep.subr.bf16.mxu0 0
  %265 = vmatpush2.bf16.msra.mxu0 0
  %266 = vmatprep.subr.bf16.mxu0 0
  %267 = vmatpush2.bf16.msra.mxu0 0
  %268 = vmatprep.subr.bf16.mxu0 0
  %269 = vmatpush2.bf16.msra.mxu0 0
  %270 = vmatprep.mubr.bf16.mxu0 0
  %271 = vmatmul.mubr.bf16.gmra.mxu0 %v222
  %v272 = vpop.f32.mrf.mxu0
  %v273 = vadd.f32 %v236, %v272
  %v274 = vpop.f32.mrf.mxu0
  %v275 = vpop.f32.mrf.mxu0
  %v276 = vadd.f32 %v236, %v275
  %v277 = vpop.f32.mrf.mxu0
  %278 = vdwg.mxu0
  %v279 = vadd.f32 %v273, %v89
  %v280 = vadd.f32 %v276, %v92
  %281 = vst.msk [vmem:[%s9] sm:$0xff] %vm50, %v279
  %282 = vst.msk [vmem:[%s9 + $0x8] sm:$0xff] %vm50, %v280
  // Predicated region
  $region38: #{_lambda_.11} parent=0 // pred_check
    _
  $region39: #{_lambda_.11} parent=0 // pred_check_branch
    %284 = sbr.rel (0) target = $region41
  $region40: #{_lambda_.11} parent=0 // pred_region
    _
  $region41: #{_lambda_.11} parent=0 // pred_fallthru
    _
  // Predicated region
  $region42: #{_lambda_.11} parent=0 // pred_check
    _
  $region43: #{_lambda_.11} parent=0 // pred_check_branch
    %286 = sbr.rel (0) target = $region45
  $region44: #{_lambda_.11} parent=0 // pred_region
    _
  $region45: #{_lambda_.11} parent=0 // pred_fallthru
    _

</llo_original>
